<compile_context>
chip_gen: v7x
topology: tpu7x:2x2x1
jax: 0.10.0
libtpu: 0.0.40
codegen_flags: <defaults>
</compile_context>

<pallas_src>
import numpy as np
import jax
import jax.numpy as jnp
from jax.experimental import pallas as pl
from jax.experimental.pallas import tpu as pltpu


# ----------------------------------------------------------------------------
# Host-side (numpy) construction of the factored spatial operators
# ----------------------------------------------------------------------------
def _avg_pool_matrix(full: int, size: int) -> np.ndarray:
    """P @ v averages `v` (length `full`) into `size` uniform bins."""
    assert full % size == 0
    block = full // size
    P = np.zeros((size, full), np.float32)
    for k in range(size):
        P[k, k * block:(k + 1) * block] = 1.0 / block
    return P


def _bilinear_up_matrix(full: int, size: int) -> np.ndarray:
    """U @ v upsamples `v` (length `size`) to `full`, align_corners=True."""
    U = np.zeros((full, size), np.float32)
    if size == 1:
        U[:, 0] = 1.0
        return U
    scale = (size - 1) / (full - 1)
    for y in range(full):
        pos = y * scale
        lo = int(np.floor(pos))
        hi = min(lo + 1, size - 1)
        frac = pos - lo
        U[y, lo] += 1.0 - frac
        U[y, hi] += frac
    return U


def build_factored_operators(H: int, W: int, sizes, hw_pad: int):
    """Returns pre-transposed, zero-padded pooling / upsample operators.

    pt[i] : (hw_pad, smax)  == P_i^T  (pool real HW columns -> s_i^2 bins)
    ut[i] : (smax, hw_pad)  == U_i^T  (bilinear upsample s_i^2 -> real HW)
    Padding rows/cols are exactly zero, so the padded slots never contribute.
    """
    HW = H * W
    smax = max(s * s for s in sizes)
    pt = np.zeros((len(sizes), hw_pad, smax), np.float32)
    ut = np.zeros((len(sizes), smax, hw_pad), np.float32)
    for i, s in enumerate(sizes):
        P2d = np.kron(_avg_pool_matrix(H, s), _avg_pool_matrix(W, s))        # (s^2, HW)
        U2d = np.kron(_bilinear_up_matrix(H, s), _bilinear_up_matrix(W, s))  # (HW, s^2)
        pt[i, :HW, :s * s] = P2d.T
        ut[i, :s * s, :HW] = U2d.T
    return pt, ut


# ----------------------------------------------------------------------------
# Pallas kernel: full PSP head for one batch block per grid step
# ----------------------------------------------------------------------------
def psp_head_kernel(f_ref, pt_ref, ut_ref, wst_ref, wbst_ref, wbid_ref,
                    bias_ref, o_ref):
    B_blk, C, HWp = f_ref.shape
    n_sizes = wst_ref.shape[0]

    f = f_ref[...]                               # (B_blk, C, HWp)
    f2 = f.reshape(B_blk * C, HWp)               # batched M for spatial matmuls
    wbid = wbid_ref[...]                         # (Cout, C)  bottleneck identity slice
    bias = bias_ref[...]                         # (Cout, 1)

    # identity branch of the bottleneck conv (per batch element)
    acc = [jnp.dot(wbid, f[b], preferred_element_type=jnp.float32)
           for b in range(B_blk)]                # each (Cout, HWp)

    # pyramid stages: pool -> 1x1 stage conv -> bottleneck slice -> upsample
    for i in range(n_sizes):                     # static, tiny unrolled loop
        pooled = jnp.dot(f2, pt_ref[i],
                         preferred_element_type=jnp.float32)   # (B_blk*C, smax)
        wi = wst_ref[i]                          # (C, C)    stage conv (no bias)
        wbi = wbst_ref[i]                        # (Cout, C) bottleneck slice
        ui = ut_ref[i]                           # (smax, HWp) upsample
        for b in range(B_blk):
            pb = pooled[b * C:(b + 1) * C]                                   # (C, smax)
            q = jnp.dot(wi, pb, preferred_element_type=jnp.float32)          # (C, smax)
            r = jnp.dot(wbi, q, preferred_element_type=jnp.float32)          # (Cout, smax)
            acc[b] = acc[b] + jnp.dot(r, ui,
                                      preferred_element_type=jnp.float32)    # (Cout, HWp)

    for b in range(B_blk):
        o_ref[b] = jnp.maximum(acc[b] + bias, 0.0).astype(o_ref.dtype)


def psp_head(f, sizes, stage_w, bottleneck_w, bottleneck_b, *, block_b=None):
    """f: (B, C, H, W) float32 -> (B, Cout, H, W) float32."""
    B, C, H, W = f.shape
    HW = H * W
    HWp = ((HW + 127) // 128) * 128              # lane-dense spatial axis
    n_sizes = len(sizes)
    Cout = bottleneck_w.shape[0]
    assert bottleneck_w.shape[1] == C * (n_sizes + 1)

    B_blk = B if block_b is None else block_b
    assert B % B_blk == 0
    grid = (B // B_blk,)

    pt_np, ut_np = build_factored_operators(H, W, sizes, HWp)
    pt = jnp.asarray(pt_np)                      # (n_sizes, HWp, smax)
    ut = jnp.asarray(ut_np)                      # (n_sizes, smax, HWp)
    smax = pt.shape[-1]

    f_flat = f.reshape(B, C, HW).astype(jnp.float32)
    if HWp != HW:
        f_flat = jnp.pad(f_flat, ((0, 0), (0, 0), (0, HWp - HW)))

    # Pre-slice bottleneck weight per concat branch (stages..., identity).
    wb = bottleneck_w.reshape(Cout, n_sizes + 1, C)
    wb_st = jnp.transpose(wb[:, :n_sizes, :], (1, 0, 2))   # (n_sizes, Cout, C)
    wb_id = wb[:, n_sizes, :]                               # (Cout, C)
    bias2d = bottleneck_b.reshape(Cout, 1)

    out = pl.pallas_call(
        psp_head_kernel,
        out_shape=jax.ShapeDtypeStruct((B, Cout, HWp), jnp.float32),
        grid_spec=pltpu.PrefetchScalarGridSpec(
            num_scalar_prefetch=0,
            grid=grid,
            in_specs=[
                pl.BlockSpec((B_blk, C, HWp), lambda g: (g, 0, 0)),
                pl.BlockSpec((n_sizes, HWp, smax), lambda g: (0, 0, 0)),
                pl.BlockSpec((n_sizes, smax, HWp), lambda g: (0, 0, 0)),
                pl.BlockSpec((n_sizes, C, C), lambda g: (0, 0, 0)),
                pl.BlockSpec((n_sizes, Cout, C), lambda g: (0, 0, 0)),
                pl.BlockSpec((Cout, C), lambda g: (0, 0)),
                pl.BlockSpec((Cout, 1), lambda g: (0, 0)),
            ],
            out_specs=pl.BlockSpec((B_blk, Cout, HWp), lambda g: (g, 0, 0)),
        ),
        compiler_params=pltpu.CompilerParams(
            dimension_semantics=("parallel",),
            vmem_limit_bytes=32 * 1024 * 1024),
    )(f_flat, pt, ut, stage_w, wb_st, wb_id, bias2d)

    return out[:, :, :HW].reshape(B, Cout, H, W)


# ----------------------------------------------------------------------------
# PsPNet wrapper
# ----------------------------------------------------------------------------
# TODO(synk): the real resnet18 backbone (`extractors` module) is external and
# not provided; a deterministic 1x1-conv + ReLU + 2x avg-pool stand-in feeds
# the PSP head (the translated module) with realistically shaped features.
def backbone_standin(x, w):
    # x: (B, 3, Hin, Win), w: (psp_size, 3)  -> f: (B, psp_size, Hin//2, Win//2)
    f = jnp.einsum('oc,bchw->bohw', w, x)
    f = jax.nn.relu(f)
    B, C, H, W = f.shape
    return f.reshape(B, C, H // 2, 2, W // 2, 2).mean(axis=(3, 5))


def pspnet_forward(x, params, sizes):
    f = backbone_standin(x, params["backbone_w"])
    return psp_head(f, sizes, params["stage_w"],
                    params["bottleneck_w"], params["bottleneck_b"])


# ----------------------------------------------------------------------------
# Pure numpy (float64) reference matching the PyTorch op order exactly:
# adaptive-avg-pool -> 1x1 conv -> bilinear upsample -> concat -> 1x1+bias -> ReLU
# ----------------------------------------------------------------------------
def psp_reference(f, sizes, stage_w, bottleneck_w, bottleneck_b):
    f = np.asarray(f, np.float64)
    stage_w = np.asarray(stage_w, np.float64)
    bottleneck_w = np.asarray(bottleneck_w, np.float64)
    bottleneck_b = np.asarray(bottleneck_b, np.float64)
    B, C, H, W = f.shape
    priors = []
    for i, s in enumerate(sizes):
        Ph = _avg_pool_matrix(H, s).astype(np.float64)
        Pw = _avg_pool_matrix(W, s).astype(np.float64)
        Uh = _bilinear_up_matrix(H, s).astype(np.float64)
        Uw = _bilinear_up_matrix(W, s).astype(np.float64)
        pooled = np.einsum('ph,bchw,qw->bcpq', Ph, f, Pw)
        conv = np.einsum('oc,bcpq->bopq', stage_w[i], pooled)
        up = np.einsum('hp,bopq,wq->bohw', Uh, conv, Uw)
        priors.append(up)
    priors.append(f)
    x = np.concatenate(priors, axis=1)
    y = np.einsum('oc,bchw->bohw', bottleneck_w, x)
    y = y + bottleneck_b[None, :, None, None]
    return np.maximum(y, 0.0)


# ----------------------------------------------------------------------------
# main
# ----------------------------------------------------------------------------
if __name__ == "__main__":
    # Small, shape-consistent config (PyTorch defaults scaled down):
    # sizes=(1,2,3,6), psp_size -> 8 channels, out_features -> 16, batch=2.
    sizes = (1, 2, 3, 6)
    B, Hin, Win = 2, 24, 24          # backbone stand-in halves spatial -> 12x12
    psp_size = 8
    out_features = 16
    H, W = Hin // 2, Win // 2        # 12 is divisible by every pyramid size

    key = jax.random.PRNGKey(0)
    k_x, k_bb, k_st, k_bw, k_bb2 = jax.random.split(key, 5)

    x = jax.random.normal(k_x, (B, 3, Hin, Win), dtype=jnp.float32)
    params = {
        "backbone_w": 0.1 * jax.random.normal(k_bb, (psp_size, 3), jnp.float32),
        "stage_w": 0.1 * jax.random.normal(
            k_st, (len(sizes), psp_size, psp_size), jnp.float32),
        "bottleneck_w": 0.1 * jax.random.normal(
            k_bw, (out_features, psp_size * (len(sizes) + 1)), jnp.float32),
        "bottleneck_b": 0.1 * jax.random.normal(
            k_bb2, (out_features,), jnp.float32),
    }

    f = backbone_standin(x, params["backbone_w"])
    out = psp_head(f, sizes, params["stage_w"],
                   params["bottleneck_w"], params["bottleneck_b"])
    out = jax.block_until_ready(out)

    assert out.shape == (B, out_features, H, W), out.shape
    assert bool(jnp.all(jnp.isfinite(out)))
    assert bool(jnp.all(out >= 0.0))   # ReLU output

    ref = psp_reference(np.asarray(f), sizes, params["stage_w"],
                        params["bottleneck_w"], params["bottleneck_b"])
    np.testing.assert_allclose(np.asarray(out), ref, rtol=5e-2, atol=5e-3)

    print("KERNEL_OK")
</pallas_src>

<mosaic_0001>
module attributes {stable_mosaic.version = 11 : i64} {
  func.func @psp_head_kernel(%arg0: i32, %arg1: memref<2x8x256xf32, #tpu.memory_space<vmem>>, %arg2: memref<4x256x36xf32, #tpu.memory_space<vmem>>, %arg3: memref<4x36x256xf32, #tpu.memory_space<vmem>>, %arg4: memref<4x8x8xf32, #tpu.memory_space<vmem>>, %arg5: memref<4x16x8xf32, #tpu.memory_space<vmem>>, %arg6: memref<16x8xf32, #tpu.memory_space<vmem>>, %arg7: memref<16x1xf32, #tpu.memory_space<vmem>>, %arg8: memref<2x16x256xf32, #tpu.memory_space<vmem>>) attributes {dimension_semantics = [#tpu.dimension_semantics<parallel>], iteration_bounds = array<i64: 1>, scalar_prefetch = 0 : i64, scratch_operands = 0 : i64, tpu.core_type = #tpu.core_type<tc>, window_params = [{transform_indices = @transform_0, window_bounds = array<i64: 2, 8, 256>}, {pipeline_mode = #tpu.pipeline_mode<synchronous>, transform_indices = @transform_1, window_bounds = array<i64: 4, 256, 36>}, {pipeline_mode = #tpu.pipeline_mode<synchronous>, transform_indices = @transform_2, window_bounds = array<i64: 4, 36, 256>}, {pipeline_mode = #tpu.pipeline_mode<synchronous>, transform_indices = @transform_3, window_bounds = array<i64: 4, 8, 8>}, {pipeline_mode = #tpu.pipeline_mode<synchronous>, transform_indices = @transform_4, window_bounds = array<i64: 4, 16, 8>}, {pipeline_mode = #tpu.pipeline_mode<synchronous>, transform_indices = @transform_5, window_bounds = array<i64: 16, 8>}, {pipeline_mode = #tpu.pipeline_mode<synchronous>, transform_indices = @transform_6, window_bounds = array<i64: 16, 1>}, {transform_indices = @transform_7, window_bounds = array<i64: 2, 16, 256>}]} {
    %c0 = arith.constant 0 : index
    %c0_0 = arith.constant 0 : index
    %c0_1 = arith.constant 0 : index
    %0 = vector.load %arg1[%c0, %c0_0, %c0_1] : memref<2x8x256xf32, #tpu.memory_space<vmem>>, vector<2x8x256xf32>
    %1 = vector.shape_cast %0 : vector<2x8x256xf32> to vector<16x256xf32>
    %c0_2 = arith.constant 0 : index
    %c0_3 = arith.constant 0 : index
    %2 = vector.load %arg6[%c0_2, %c0_3] : memref<16x8xf32, #tpu.memory_space<vmem>>, vector<16x8xf32>
    %c0_4 = arith.constant 0 : index
    %c0_5 = arith.constant 0 : index
    %3 = vector.load %arg7[%c0_4, %c0_5] : memref<16x1xf32, #tpu.memory_space<vmem>>, vector<16x1xf32>
    %4 = vector.extract_strided_slice %0 {offsets = [0, 0, 0], sizes = [1, 8, 256], strides = [1, 1, 1]} : vector<2x8x256xf32> to vector<1x8x256xf32>
    %5 = vector.shape_cast %4 : vector<1x8x256xf32> to vector<8x256xf32>
    %cst = arith.constant dense<0.000000e+00> : vector<16x256xf32>
    %6 = tpu.matmul %2, %5, %cst {dimension_numbers = #tpu.dot_dimension_numbers<[1], [0], [0], [1], [0, 0, 1, 1], [], []>} : vector<16x8xf32>, vector<8x256xf32>, vector<16x256xf32> -> vector<16x256xf32>
    %7 = vector.extract_strided_slice %0 {offsets = [1, 0, 0], sizes = [1, 8, 256], strides = [1, 1, 1]} : vector<2x8x256xf32> to vector<1x8x256xf32>
    %8 = vector.shape_cast %7 : vector<1x8x256xf32> to vector<8x256xf32>
    %cst_6 = arith.constant dense<0.000000e+00> : vector<16x256xf32>
    %9 = tpu.matmul %2, %8, %cst_6 {dimension_numbers = #tpu.dot_dimension_numbers<[1], [0], [0], [1], [0, 0, 1, 1], [], []>} : vector<16x8xf32>, vector<8x256xf32>, vector<16x256xf32> -> vector<16x256xf32>
    %c0_7 = arith.constant 0 : index
    %c0_8 = arith.constant 0 : index
    %c0_9 = arith.constant 0 : index
    %10 = vector.load %arg2[%c0_7, %c0_8, %c0_9] : memref<4x256x36xf32, #tpu.memory_space<vmem>>, vector<1x256x36xf32>
    %11 = vector.shape_cast %10 : vector<1x256x36xf32> to vector<256x36xf32>
    %cst_10 = arith.constant dense<0.000000e+00> : vector<16x36xf32>
    %12 = tpu.matmul %1, %11, %cst_10 {dimension_numbers = #tpu.dot_dimension_numbers<[1], [0], [0], [1], [0, 0, 1, 1], [], []>} : vector<16x256xf32>, vector<256x36xf32>, vector<16x36xf32> -> vector<16x36xf32>
    %c0_11 = arith.constant 0 : index
    %c0_12 = arith.constant 0 : index
    %c0_13 = arith.constant 0 : index
    %13 = vector.load %arg4[%c0_11, %c0_12, %c0_13] : memref<4x8x8xf32, #tpu.memory_space<vmem>>, vector<1x8x8xf32>
    %14 = vector.shape_cast %13 : vector<1x8x8xf32> to vector<8x8xf32>
    %c0_14 = arith.constant 0 : index
    %c0_15 = arith.constant 0 : index
    %c0_16 = arith.constant 0 : index
    %15 = vector.load %arg5[%c0_14, %c0_15, %c0_16] : memref<4x16x8xf32, #tpu.memory_space<vmem>>, vector<1x16x8xf32>
    %16 = vector.shape_cast %15 : vector<1x16x8xf32> to vector<16x8xf32>
    %c0_17 = arith.constant 0 : index
    %c0_18 = arith.constant 0 : index
    %c0_19 = arith.constant 0 : index
    %17 = vector.load %arg3[%c0_17, %c0_18, %c0_19] : memref<4x36x256xf32, #tpu.memory_space<vmem>>, vector<1x36x256xf32>
    %18 = vector.shape_cast %17 : vector<1x36x256xf32> to vector<36x256xf32>
    %19 = vector.extract_strided_slice %12 {offsets = [0, 0], sizes = [8, 36], strides = [1, 1]} : vector<16x36xf32> to vector<8x36xf32>
    %cst_20 = arith.constant dense<0.000000e+00> : vector<8x36xf32>
    %20 = tpu.matmul %14, %19, %cst_20 {dimension_numbers = #tpu.dot_dimension_numbers<[1], [0], [0], [1], [0, 0, 1, 1], [], []>} : vector<8x8xf32>, vector<8x36xf32>, vector<8x36xf32> -> vector<8x36xf32>
    %cst_21 = arith.constant dense<0.000000e+00> : vector<16x36xf32>
    %21 = tpu.matmul %16, %20, %cst_21 {dimension_numbers = #tpu.dot_dimension_numbers<[1], [0], [0], [1], [0, 0, 1, 1], [], []>} : vector<16x8xf32>, vector<8x36xf32>, vector<16x36xf32> -> vector<16x36xf32>
    %cst_22 = arith.constant dense<0.000000e+00> : vector<16x256xf32>
    %22 = tpu.matmul %21, %18, %cst_22 {dimension_numbers = #tpu.dot_dimension_numbers<[1], [0], [0], [1], [0, 0, 1, 1], [], []>} : vector<16x36xf32>, vector<36x256xf32>, vector<16x256xf32> -> vector<16x256xf32>
    %23 = arith.addf %6, %22 : vector<16x256xf32>
    %24 = vector.extract_strided_slice %12 {offsets = [8, 0], sizes = [8, 36], strides = [1, 1]} : vector<16x36xf32> to vector<8x36xf32>
    %cst_23 = arith.constant dense<0.000000e+00> : vector<8x36xf32>
    %25 = tpu.matmul %14, %24, %cst_23 {dimension_numbers = #tpu.dot_dimension_numbers<[1], [0], [0], [1], [0, 0, 1, 1], [], []>} : vector<8x8xf32>, vector<8x36xf32>, vector<8x36xf32> -> vector<8x36xf32>
    %cst_24 = arith.constant dense<0.000000e+00> : vector<16x36xf32>
    %26 = tpu.matmul %16, %25, %cst_24 {dimension_numbers = #tpu.dot_dimension_numbers<[1], [0], [0], [1], [0, 0, 1, 1], [], []>} : vector<16x8xf32>, vector<8x36xf32>, vector<16x36xf32> -> vector<16x36xf32>
    %cst_25 = arith.constant dense<0.000000e+00> : vector<16x256xf32>
    %27 = tpu.matmul %26, %18, %cst_25 {dimension_numbers = #tpu.dot_dimension_numbers<[1], [0], [0], [1], [0, 0, 1, 1], [], []>} : vector<16x36xf32>, vector<36x256xf32>, vector<16x256xf32> -> vector<16x256xf32>
    %28 = arith.addf %9, %27 : vector<16x256xf32>
    %c1 = arith.constant 1 : index
    %c0_26 = arith.constant 0 : index
    %c0_27 = arith.constant 0 : index
    %29 = vector.load %arg2[%c1, %c0_26, %c0_27] : memref<4x256x36xf32, #tpu.memory_space<vmem>>, vector<1x256x36xf32>
    %30 = vector.shape_cast %29 : vector<1x256x36xf32> to vector<256x36xf32>
    %cst_28 = arith.constant dense<0.000000e+00> : vector<16x36xf32>
    %31 = tpu.matmul %1, %30, %cst_28 {dimension_numbers = #tpu.dot_dimension_numbers<[1], [0], [0], [1], [0, 0, 1, 1], [], []>} : vector<16x256xf32>, vector<256x36xf32>, vector<16x36xf32> -> vector<16x36xf32>
    %c1_29 = arith.constant 1 : index
    %c0_30 = arith.constant 0 : index
    %c0_31 = arith.constant 0 : index
    %32 = vector.load %arg4[%c1_29, %c0_30, %c0_31] : memref<4x8x8xf32, #tpu.memory_space<vmem>>, vector<1x8x8xf32>
    %33 = vector.shape_cast %32 : vector<1x8x8xf32> to vector<8x8xf32>
    %c1_32 = arith.constant 1 : index
    %c0_33 = arith.constant 0 : index
    %c0_34 = arith.constant 0 : index
    %34 = vector.load %arg5[%c1_32, %c0_33, %c0_34] : memref<4x16x8xf32, #tpu.memory_space<vmem>>, vector<1x16x8xf32>
    %35 = vector.shape_cast %34 : vector<1x16x8xf32> to vector<16x8xf32>
    %c1_35 = arith.constant 1 : index
    %c0_36 = arith.constant 0 : index
    %c0_37 = arith.constant 0 : index
    %36 = vector.load %arg3[%c1_35, %c0_36, %c0_37] : memref<4x36x256xf32, #tpu.memory_space<vmem>>, vector<1x36x256xf32>
    %37 = vector.shape_cast %36 : vector<1x36x256xf32> to vector<36x256xf32>
    %38 = vector.extract_strided_slice %31 {offsets = [0, 0], sizes = [8, 36], strides = [1, 1]} : vector<16x36xf32> to vector<8x36xf32>
    %cst_38 = arith.constant dense<0.000000e+00> : vector<8x36xf32>
    %39 = tpu.matmul %33, %38, %cst_38 {dimension_numbers = #tpu.dot_dimension_numbers<[1], [0], [0], [1], [0, 0, 1, 1], [], []>} : vector<8x8xf32>, vector<8x36xf32>, vector<8x36xf32> -> vector<8x36xf32>
    %cst_39 = arith.constant dense<0.000000e+00> : vector<16x36xf32>
    %40 = tpu.matmul %35, %39, %cst_39 {dimension_numbers = #tpu.dot_dimension_numbers<[1], [0], [0], [1], [0, 0, 1, 1], [], []>} : vector<16x8xf32>, vector<8x36xf32>, vector<16x36xf32> -> vector<16x36xf32>
    %cst_40 = arith.constant dense<0.000000e+00> : vector<16x256xf32>
    %41 = tpu.matmul %40, %37, %cst_40 {dimension_numbers = #tpu.dot_dimension_numbers<[1], [0], [0], [1], [0, 0, 1, 1], [], []>} : vector<16x36xf32>, vector<36x256xf32>, vector<16x256xf32> -> vector<16x256xf32>
    %42 = arith.addf %23, %41 : vector<16x256xf32>
    %43 = vector.extract_strided_slice %31 {offsets = [8, 0], sizes = [8, 36], strides = [1, 1]} : vector<16x36xf32> to vector<8x36xf32>
    %cst_41 = arith.constant dense<0.000000e+00> : vector<8x36xf32>
    %44 = tpu.matmul %33, %43, %cst_41 {dimension_numbers = #tpu.dot_dimension_numbers<[1], [0], [0], [1], [0, 0, 1, 1], [], []>} : vector<8x8xf32>, vector<8x36xf32>, vector<8x36xf32> -> vector<8x36xf32>
    %cst_42 = arith.constant dense<0.000000e+00> : vector<16x36xf32>
    %45 = tpu.matmul %35, %44, %cst_42 {dimension_numbers = #tpu.dot_dimension_numbers<[1], [0], [0], [1], [0, 0, 1, 1], [], []>} : vector<16x8xf32>, vector<8x36xf32>, vector<16x36xf32> -> vector<16x36xf32>
    %cst_43 = arith.constant dense<0.000000e+00> : vector<16x256xf32>
    %46 = tpu.matmul %45, %37, %cst_43 {dimension_numbers = #tpu.dot_dimension_numbers<[1], [0], [0], [1], [0, 0, 1, 1], [], []>} : vector<16x36xf32>, vector<36x256xf32>, vector<16x256xf32> -> vector<16x256xf32>
    %47 = arith.addf %28, %46 : vector<16x256xf32>
    %c2 = arith.constant 2 : index
    %c0_44 = arith.constant 0 : index
    %c0_45 = arith.constant 0 : index
    %48 = vector.load %arg2[%c2, %c0_44, %c0_45] : memref<4x256x36xf32, #tpu.memory_space<vmem>>, vector<1x256x36xf32>
    %49 = vector.shape_cast %48 : vector<1x256x36xf32> to vector<256x36xf32>
    %cst_46 = arith.constant dense<0.000000e+00> : vector<16x36xf32>
    %50 = tpu.matmul %1, %49, %cst_46 {dimension_numbers = #tpu.dot_dimension_numbers<[1], [0], [0], [1], [0, 0, 1, 1], [], []>} : vector<16x256xf32>, vector<256x36xf32>, vector<16x36xf32> -> vector<16x36xf32>
    %c2_47 = arith.constant 2 : index
    %c0_48 = arith.constant 0 : index
    %c0_49 = arith.constant 0 : index
    %51 = vector.load %arg4[%c2_47, %c0_48, %c0_49] : memref<4x8x8xf32, #tpu.memory_space<vmem>>, vector<1x8x8xf32>
    %52 = vector.shape_cast %51 : vector<1x8x8xf32> to vector<8x8xf32>
    %c2_50 = arith.constant 2 : index
    %c0_51 = arith.constant 0 : index
    %c0_52 = arith.constant 0 : index
    %53 = vector.load %arg5[%c2_50, %c0_51, %c0_52] : memref<4x16x8xf32, #tpu.memory_space<vmem>>, vector<1x16x8xf32>
    %54 = vector.shape_cast %53 : vector<1x16x8xf32> to vector<16x8xf32>
    %c2_53 = arith.constant 2 : index
    %c0_54 = arith.constant 0 : index
    %c0_55 = arith.constant 0 : index
    %55 = vector.load %arg3[%c2_53, %c0_54, %c0_55] : memref<4x36x256xf32, #tpu.memory_space<vmem>>, vector<1x36x256xf32>
    %56 = vector.shape_cast %55 : vector<1x36x256xf32> to vector<36x256xf32>
    %57 = vector.extract_strided_slice %50 {offsets = [0, 0], sizes = [8, 36], strides = [1, 1]} : vector<16x36xf32> to vector<8x36xf32>
    %cst_56 = arith.constant dense<0.000000e+00> : vector<8x36xf32>
    %58 = tpu.matmul %52, %57, %cst_56 {dimension_numbers = #tpu.dot_dimension_numbers<[1], [0], [0], [1], [0, 0, 1, 1], [], []>} : vector<8x8xf32>, vector<8x36xf32>, vector<8x36xf32> -> vector<8x36xf32>
    %cst_57 = arith.constant dense<0.000000e+00> : vector<16x36xf32>
    %59 = tpu.matmul %54, %58, %cst_57 {dimension_numbers = #tpu.dot_dimension_numbers<[1], [0], [0], [1], [0, 0, 1, 1], [], []>} : vector<16x8xf32>, vector<8x36xf32>, vector<16x36xf32> -> vector<16x36xf32>
    %cst_58 = arith.constant dense<0.000000e+00> : vector<16x256xf32>
    %60 = tpu.matmul %59, %56, %cst_58 {dimension_numbers = #tpu.dot_dimension_numbers<[1], [0], [0], [1], [0, 0, 1, 1], [], []>} : vector<16x36xf32>, vector<36x256xf32>, vector<16x256xf32> -> vector<16x256xf32>
    %61 = arith.addf %42, %60 : vector<16x256xf32>
    %62 = vector.extract_strided_slice %50 {offsets = [8, 0], sizes = [8, 36], strides = [1, 1]} : vector<16x36xf32> to vector<8x36xf32>
    %cst_59 = arith.constant dense<0.000000e+00> : vector<8x36xf32>
    %63 = tpu.matmul %52, %62, %cst_59 {dimension_numbers = #tpu.dot_dimension_numbers<[1], [0], [0], [1], [0, 0, 1, 1], [], []>} : vector<8x8xf32>, vector<8x36xf32>, vector<8x36xf32> -> vector<8x36xf32>
    %cst_60 = arith.constant dense<0.000000e+00> : vector<16x36xf32>
    %64 = tpu.matmul %54, %63, %cst_60 {dimension_numbers = #tpu.dot_dimension_numbers<[1], [0], [0], [1], [0, 0, 1, 1], [], []>} : vector<16x8xf32>, vector<8x36xf32>, vector<16x36xf32> -> vector<16x36xf32>
    %cst_61 = arith.constant dense<0.000000e+00> : vector<16x256xf32>
    %65 = tpu.matmul %64, %56, %cst_61 {dimension_numbers = #tpu.dot_dimension_numbers<[1], [0], [0], [1], [0, 0, 1, 1], [], []>} : vector<16x36xf32>, vector<36x256xf32>, vector<16x256xf32> -> vector<16x256xf32>
    %66 = arith.addf %47, %65 : vector<16x256xf32>
    %c3 = arith.constant 3 : index
    %c0_62 = arith.constant 0 : index
    %c0_63 = arith.constant 0 : index
    %67 = vector.load %arg2[%c3, %c0_62, %c0_63] : memref<4x256x36xf32, #tpu.memory_space<vmem>>, vector<1x256x36xf32>
    %68 = vector.shape_cast %67 : vector<1x256x36xf32> to vector<256x36xf32>
    %cst_64 = arith.constant dense<0.000000e+00> : vector<16x36xf32>
    %69 = tpu.matmul %1, %68, %cst_64 {dimension_numbers = #tpu.dot_dimension_numbers<[1], [0], [0], [1], [0, 0, 1, 1], [], []>} : vector<16x256xf32>, vector<256x36xf32>, vector<16x36xf32> -> vector<16x36xf32>
    %c3_65 = arith.constant 3 : index
    %c0_66 = arith.constant 0 : index
    %c0_67 = arith.constant 0 : index
    %70 = vector.load %arg4[%c3_65, %c0_66, %c0_67] : memref<4x8x8xf32, #tpu.memory_space<vmem>>, vector<1x8x8xf32>
    %71 = vector.shape_cast %70 : vector<1x8x8xf32> to vector<8x8xf32>
    %c3_68 = arith.constant 3 : index
    %c0_69 = arith.constant 0 : index
    %c0_70 = arith.constant 0 : index
    %72 = vector.load %arg5[%c3_68, %c0_69, %c0_70] : memref<4x16x8xf32, #tpu.memory_space<vmem>>, vector<1x16x8xf32>
    %73 = vector.shape_cast %72 : vector<1x16x8xf32> to vector<16x8xf32>
    %c3_71 = arith.constant 3 : index
    %c0_72 = arith.constant 0 : index
    %c0_73 = arith.constant 0 : index
    %74 = vector.load %arg3[%c3_71, %c0_72, %c0_73] : memref<4x36x256xf32, #tpu.memory_space<vmem>>, vector<1x36x256xf32>
    %75 = vector.shape_cast %74 : vector<1x36x256xf32> to vector<36x256xf32>
    %76 = vector.extract_strided_slice %69 {offsets = [0, 0], sizes = [8, 36], strides = [1, 1]} : vector<16x36xf32> to vector<8x36xf32>
    %cst_74 = arith.constant dense<0.000000e+00> : vector<8x36xf32>
    %77 = tpu.matmul %71, %76, %cst_74 {dimension_numbers = #tpu.dot_dimension_numbers<[1], [0], [0], [1], [0, 0, 1, 1], [], []>} : vector<8x8xf32>, vector<8x36xf32>, vector<8x36xf32> -> vector<8x36xf32>
    %cst_75 = arith.constant dense<0.000000e+00> : vector<16x36xf32>
    %78 = tpu.matmul %73, %77, %cst_75 {dimension_numbers = #tpu.dot_dimension_numbers<[1], [0], [0], [1], [0, 0, 1, 1], [], []>} : vector<16x8xf32>, vector<8x36xf32>, vector<16x36xf32> -> vector<16x36xf32>
    %cst_76 = arith.constant dense<0.000000e+00> : vector<16x256xf32>
    %79 = tpu.matmul %78, %75, %cst_76 {dimension_numbers = #tpu.dot_dimension_numbers<[1], [0], [0], [1], [0, 0, 1, 1], [], []>} : vector<16x36xf32>, vector<36x256xf32>, vector<16x256xf32> -> vector<16x256xf32>
    %80 = arith.addf %61, %79 : vector<16x256xf32>
    %81 = vector.extract_strided_slice %69 {offsets = [8, 0], sizes = [8, 36], strides = [1, 1]} : vector<16x36xf32> to vector<8x36xf32>
    %cst_77 = arith.constant dense<0.000000e+00> : vector<8x36xf32>
    %82 = tpu.matmul %71, %81, %cst_77 {dimension_numbers = #tpu.dot_dimension_numbers<[1], [0], [0], [1], [0, 0, 1, 1], [], []>} : vector<8x8xf32>, vector<8x36xf32>, vector<8x36xf32> -> vector<8x36xf32>
    %cst_78 = arith.constant dense<0.000000e+00> : vector<16x36xf32>
    %83 = tpu.matmul %73, %82, %cst_78 {dimension_numbers = #tpu.dot_dimension_numbers<[1], [0], [0], [1], [0, 0, 1, 1], [], []>} : vector<16x8xf32>, vector<8x36xf32>, vector<16x36xf32> -> vector<16x36xf32>
    %cst_79 = arith.constant dense<0.000000e+00> : vector<16x256xf32>
    %84 = tpu.matmul %83, %75, %cst_79 {dimension_numbers = #tpu.dot_dimension_numbers<[1], [0], [0], [1], [0, 0, 1, 1], [], []>} : vector<16x36xf32>, vector<36x256xf32>, vector<16x256xf32> -> vector<16x256xf32>
    %85 = arith.addf %66, %84 : vector<16x256xf32>
    %86 = vector.broadcast %3 : vector<16x1xf32> to vector<16x256xf32>
    %87 = arith.addf %80, %86 : vector<16x256xf32>
    %cst_80 = arith.constant 0.000000e+00 : f32
    %88 = vector.broadcast %cst_80 : f32 to vector<16x256xf32>
    %89 = arith.maximumf %87, %88 : vector<16x256xf32>
    %c0_81 = arith.constant 0 : index
    %c0_82 = arith.constant 0 : index
    %c0_83 = arith.constant 0 : index
    %90 = vector.load %arg8[%c0_81, %c0_82, %c0_83] : memref<2x16x256xf32, #tpu.memory_space<vmem>>, vector<1x16x256xf32>
    %91 = vector.shape_cast %90 : vector<1x16x256xf32> to vector<16x256xf32>
    %92 = vector.shape_cast %89 : vector<16x256xf32> to vector<1x16x256xf32>
    tpu.vector_store %arg8[%c0_81, %c0_82, %c0_83], %92 {strides = array<i32>} : memref<2x16x256xf32, #tpu.memory_space<vmem>>, vector<1x16x256xf32>,
    %93 = vector.broadcast %3 : vector<16x1xf32> to vector<16x256xf32>
    %94 = arith.addf %85, %93 : vector<16x256xf32>
    %cst_84 = arith.constant 0.000000e+00 : f32
    %95 = vector.broadcast %cst_84 : f32 to vector<16x256xf32>
    %96 = arith.maximumf %94, %95 : vector<16x256xf32>
    %c1_85 = arith.constant 1 : index
    %c0_86 = arith.constant 0 : index
    %c0_87 = arith.constant 0 : index
    %97 = vector.load %arg8[%c1_85, %c0_86, %c0_87] : memref<2x16x256xf32, #tpu.memory_space<vmem>>, vector<1x16x256xf32>
    %98 = vector.shape_cast %97 : vector<1x16x256xf32> to vector<16x256xf32>
    %99 = vector.shape_cast %96 : vector<16x256xf32> to vector<1x16x256xf32>
    tpu.vector_store %arg8[%c1_85, %c0_86, %c0_87], %99 {strides = array<i32>} : memref<2x16x256xf32, #tpu.memory_space<vmem>>, vector<1x16x256xf32>,
    return
  }
  func.func @transform_0(%arg0: i32) -> (i32, i32, i32) {
    %c0_i32 = arith.constant 0 : i32
    %c0_i32_0 = arith.constant 0 : i32
    %c0_i32_1 = arith.constant 0 : i32
    return %arg0, %c0_i32, %c0_i32_0 : i32, i32, i32
  }
  func.func @transform_1(%arg0: i32) -> (i32, i32, i32) {
    %c0_i32 = arith.constant 0 : i32
    %c0_i32_0 = arith.constant 0 : i32
    %c0_i32_1 = arith.constant 0 : i32
    %c0_i32_2 = arith.constant 0 : i32
    return %c0_i32, %c0_i32_0, %c0_i32_1 : i32, i32, i32
  }
  func.func @transform_2(%arg0: i32) -> (i32, i32, i32) {
    %c0_i32 = arith.constant 0 : i32
    %c0_i32_0 = arith.constant 0 : i32
    %c0_i32_1 = arith.constant 0 : i32
    %c0_i32_2 = arith.constant 0 : i32
    return %c0_i32, %c0_i32_0, %c0_i32_1 : i32, i32, i32
  }
  func.func @transform_3(%arg0: i32) -> (i32, i32, i32) {
    %c0_i32 = arith.constant 0 : i32
    %c0_i32_0 = arith.constant 0 : i32
    %c0_i32_1 = arith.constant 0 : i32
    %c0_i32_2 = arith.constant 0 : i32
    return %c0_i32, %c0_i32_0, %c0_i32_1 : i32, i32, i32
  }
  func.func @transform_4(%arg0: i32) -> (i32, i32, i32) {
    %c0_i32 = arith.constant 0 : i32
    %c0_i32_0 = arith.constant 0 : i32
    %c0_i32_1 = arith.constant 0 : i32
    %c0_i32_2 = arith.constant 0 : i32
    return %c0_i32, %c0_i32_0, %c0_i32_1 : i32, i32, i32
  }
  func.func @transform_5(%arg0: i32) -> (i32, i32) {
    %c0_i32 = arith.constant 0 : i32
    %c0_i32_0 = arith.constant 0 : i32
    %c0_i32_1 = arith.constant 0 : i32
    return %c0_i32, %c0_i32_0 : i32, i32
  }
  func.func @transform_6(%arg0: i32) -> (i32, i32) {
    %c0_i32 = arith.constant 0 : i32
    %c0_i32_0 = arith.constant 0 : i32
    %c0_i32_1 = arith.constant 0 : i32
    return %c0_i32, %c0_i32_0 : i32, i32
  }
  func.func @transform_7(%arg0: i32) -> (i32, i32, i32) {
    %c0_i32 = arith.constant 0 : i32
    %c0_i32_0 = arith.constant 0 : i32
    %c0_i32_1 = arith.constant 0 : i32
    return %arg0, %c0_i32, %c0_i32_0 : i32, i32, i32
  }
}

</mosaic_0001>

<llo_original>
// kernel: tpu_custom_call.1
$region0: #{tpu_custom_call.1}
  #allocation0 [shape = 'u32[]', space=smem, size = 0x4, offset = 0x4, fixed_abs, tag = 'smem constant byte address 0x4 - core index']
  #allocation1 [shape = 'u32[144,128]{1,0:T(1,128)}', space=vmem, size = 0x12000, scoped, tag = 'internal scratch']
  %s0 = inlined_call_operand.vmem [shape: f32[2,8,256], index: 0, kind: input, shape index: {}]
  %s1 = inlined_call_operand.vmem [shape: f32[4,256,36], index: 1, kind: input, shape index: {}]
  %s2 = inlined_call_operand.vmem [shape: f32[4,36,256], index: 2, kind: input, shape index: {}]
  %s3 = inlined_call_operand.vmem [shape: f32[4,8,8], index: 3, kind: input, shape index: {}]
  %s4 = inlined_call_operand.vmem [shape: f32[4,16,8], index: 4, kind: input, shape index: {}]
  %s5 = inlined_call_operand.vmem [shape: f32[16,8], index: 5, kind: input, shape index: {}]
  %s6 = inlined_call_operand.vmem [shape: f32[16,1], index: 6, kind: input, shape index: {}]
  %s7 = inlined_call_operand.hbm [shape: f32[2,16,256], index: 7, kind: output, shape index: {}]
  %s8 = sld [smem:[#allocation0]]
  $region38: #{tpu_custom_call.1} parent=0
    _
  %s10 = ssub.s32 1, %s8
  %s11 = scalar_select 0, %s10, %s8
  $region1: #{tpu_custom_call.1} parent=0
    #allocation2 [shape = 'u8[32768]{0}', space=vmem, size = 0x8000, scoped, tag = 'output window, operand 0, single buffered']
    #allocation3 [shape = 's32[1]{0}', space=sflag, size = 0x4, scoped, tag = 'scoped memory for tpu_custom_call.1']
    %12 = vsyncpa [#allocation3], 0
    // Predicated region
    $region2: #{tpu_custom_call.1} parent=1 // pred_check
      _
    $region3: #{tpu_custom_call.1} parent=1 // pred_check_branch
      %14 = sbr.rel (0) target = $region5
    $region4: #{tpu_custom_call.1} parent=1 // pred_region
      _
    $region5: #{tpu_custom_call.1} parent=1 // pred_fallthru
      _
    // Predicated region
    $region6: #{tpu_custom_call.1} parent=1 // pred_check
      _
    $region7: #{tpu_custom_call.1} parent=1 // pred_check_branch
      %16 = sbr.rel (0) target = $region9
    $region8: #{tpu_custom_call.1} parent=1 // pred_region
      _
    $region9: #{tpu_custom_call.1} parent=1 // pred_fallthru
      _
    // Predicated region
    $region10: #{tpu_custom_call.1} parent=1 // pred_check
      _
    $region11: #{tpu_custom_call.1} parent=1 // pred_check_branch
      %18 = sbr.rel (0) target = $region13
    $region12: #{tpu_custom_call.1} parent=1 // pred_region
      _
    $region13: #{tpu_custom_call.1} parent=1 // pred_fallthru
      _
    // Predicated region
    $region14: #{tpu_custom_call.1} parent=1 // pred_check
      _
    $region15: #{tpu_custom_call.1} parent=1 // pred_check_branch
      %20 = sbr.rel (0) target = $region17
    $region16: #{tpu_custom_call.1} parent=1 // pred_region
      _
    $region17: #{tpu_custom_call.1} parent=1 // pred_fallthru
      _
    // Predicated region
    $region18: #{tpu_custom_call.1} parent=1 // pred_check
      _
    $region19: #{tpu_custom_call.1} parent=1 // pred_check_branch
      %22 = sbr.rel (0) target = $region21
    $region20: #{tpu_custom_call.1} parent=1 // pred_region
      _
    $region21: #{tpu_custom_call.1} parent=1 // pred_fallthru
      _
    // Predicated region
    $region22: #{tpu_custom_call.1} parent=1 // pred_check
      _
    $region23: #{tpu_custom_call.1} parent=1 // pred_check_branch
      %24 = sbr.rel (0) target = $region25
    $region24: #{tpu_custom_call.1} parent=1 // pred_region
      _
    $region25: #{tpu_custom_call.1} parent=1 // pred_fallthru
      _
    // Predicated region
    $region26: #{tpu_custom_call.1} parent=1 // pred_check
      _
    $region27: #{tpu_custom_call.1} parent=1 // pred_check_branch
      %26 = sbr.rel (0) target = $region29
    $region28: #{tpu_custom_call.1} parent=1 // pred_region
      _
    $region29: #{tpu_custom_call.1} parent=1 // pred_fallthru
      _
    %v27 = vld [vmem:[%s0] sm:$0xff]
    %v28 = vld [vmem:[%s0 + $0x8] sm:$0xff]
    %v29 = vld [vmem:[%s0 + $0x10] sm:$0xff]
    %v30 = vld [vmem:[%s0 + $0x18] sm:$0xff]
    %v31 = vld [vmem:[%s5] sm:$0xff]
    %v32 = vld [vmem:[%s5 + $0x8] sm:$0xff]
    %v33 = vld [vmem:[%s6] sm:$0xff]
    %v34 = vld [vmem:[%s6 + $0x8] sm:$0xff]
    %v35 = vld [vmem:[%s1] sm:$0xff]
    %v36 = vld [vmem:[%s1 + $0x8] sm:$0xff]
    %v37 = vld [vmem:[%s1 + $0x10] sm:$0xff]
    %v38 = vld [vmem:[%s1 + $0x18] sm:$0xff]
    %v39 = vld [vmem:[%s1 + $0x20] sm:$0xff]
    %v40 = vld [vmem:[%s1 + $0x28] sm:$0xff]
    %v41 = vld [vmem:[%s1 + $0x30] sm:$0xff]
    %v42 = vld [vmem:[%s1 + $0x38] sm:$0xff]
    %v43 = vld [vmem:[%s1 + $0x40] sm:$0xff]
    %v44 = vld [vmem:[%s1 + $0x48] sm:$0xff]
    %v45 = vld [vmem:[%s1 + $0x50] sm:$0xff]
    %v46 = vld [vmem:[%s1 + $0x58] sm:$0xff]
    %v47 = vld [vmem:[%s1 + $0x60] sm:$0xff]
    %v48 = vld [vmem:[%s1 + $0x68] sm:$0xff]
    %v49 = vld [vmem:[%s1 + $0x70] sm:$0xff]
    %v50 = vld [vmem:[%s1 + $0x78] sm:$0xff]
    %v51 = vld [vmem:[%s1 + $0x80] sm:$0xff]
    %v52 = vld [vmem:[%s1 + $0x88] sm:$0xff]
    %v53 = vld [vmem:[%s1 + $0x90] sm:$0xff]
    %v54 = vld [vmem:[%s1 + $0x98] sm:$0xff]
    %v55 = vld [vmem:[%s1 + $0xa0] sm:$0xff]
    %v56 = vld [vmem:[%s1 + $0xa8] sm:$0xff]
    %v57 = vld [vmem:[%s1 + $0xb0] sm:$0xff]
    %v58 = vld [vmem:[%s1 + $0xb8] sm:$0xff]
    %v59 = vld [vmem:[%s1 + $0xc0] sm:$0xff]
    %v60 = vld [vmem:[%s1 + $0xc8] sm:$0xff]
    %v61 = vld [vmem:[%s1 + $0xd0] sm:$0xff]
    %v62 = vld [vmem:[%s1 + $0xd8] sm:$0xff]
    %v63 = vld [vmem:[%s1 + $0xe0] sm:$0xff]
    %v64 = vld [vmem:[%s1 + $0xe8] sm:$0xff]
    %v65 = vld [vmem:[%s1 + $0xf0] sm:$0xff]
    %v66 = vld [vmem:[%s1 + $0xf8] sm:$0xff]
    %67 = vmatprep.subr.mxu0 0.0
    %68 = vmatpush1.msra.mxu0 %v35
    %69 = vmatprep.subr.mxu0 0.0
    %70 = vmatpush1.msra.mxu0 %v36
    %71 = vmatprep.subr.mxu0 0.0
    %72 = vmatpush1.msra.mxu0 %v37
    %73 = vmatprep.subr.mxu0 0.0
    %74 = vmatpush1.msra.mxu0 %v38
    %75 = vmatprep.subr.mxu0 0.0
    %76 = vmatpush1.msra.mxu0 %v39
    %77 = vmatprep.subr.mxu0 0.0
    %78 = vmatpush1.msra.mxu0 %v40
    %79 = vmatprep.subr.mxu0 0.0
    %80 = vmatpush1.msra.mxu0 %v41
    %81 = vmatprep.subr.mxu0 0.0
    %82 = vmatpush1.msra.mxu0 %v42
    %83 = vmatprep.subr.mxu0 0.0
    %84 = vmatpush1.msra.mxu0 %v43
    %85 = vmatprep.subr.mxu0 0.0
    %86 = vmatpush1.msra.mxu0 %v44
    %87 = vmatprep.subr.mxu0 0.0
    %88 = vmatpush1.msra.mxu0 %v45
    %89 = vmatprep.subr.mxu0 0.0
    %90 = vmatpush1.msra.mxu0 %v46
    %91 = vmatprep.subr.mxu0 0.0
    %92 = vmatpush1.msra.mxu0 %v47
    %93 = vmatprep.subr.mxu0 0.0
    %94 = vmatpush1.msra.mxu0 %v48
    %95 = vmatprep.subr.mxu0 0.0
    %96 = vmatpush1.msra.mxu0 %v49
    %97 = vmatprep.subr.mxu0 0.0
    %98 = vmatpush1.msra.mxu0 %v50
    %99 = vmatprep.subr.mxu0 0.0
    %100 = vmatpush1.msra.mxu0 %v51
    %101 = vmatprep.subr.mxu0 0.0
    %102 = vmatpush1.msra.mxu0 %v52
    %103 = vmatprep.subr.mxu0 0.0
    %104 = vmatpush1.msra.mxu0 %v53
    %105 = vmatprep.subr.mxu0 0.0
    %106 = vmatpush1.msra.mxu0 %v54
    %107 = vmatprep.subr.mxu0 0.0
    %108 = vmatpush1.msra.mxu0 %v55
    %109 = vmatprep.subr.mxu0 0.0
    %110 = vmatpush1.msra.mxu0 %v56
    %111 = vmatprep.subr.mxu0 0.0
    %112 = vmatpush1.msra.mxu0 %v57
    %113 = vmatprep.subr.mxu0 0.0
    %114 = vmatpush1.msra.mxu0 %v58
    %115 = vmatprep.subr.mxu0 0.0
    %116 = vmatpush1.msra.mxu0 %v59
    %117 = vmatprep.subr.mxu0 0.0
    %118 = vmatpush1.msra.mxu0 %v60
    %119 = vmatprep.subr.mxu0 0.0
    %120 = vmatpush1.msra.mxu0 %v61
    %121 = vmatprep.subr.mxu0 0.0
    %122 = vmatpush1.msra.mxu0 %v62
    %123 = vmatprep.subr.mxu0 0.0
    %124 = vmatpush1.msra.mxu0 %v63
    %125 = vmatprep.subr.mxu0 0.0
    %126 = vmatpush1.msra.mxu0 %v64
    %127 = vmatprep.subr.mxu0 0.0
    %128 = vmatpush1.msra.mxu0 %v65
    %129 = vmatprep.subr.mxu0 0.0
    %130 = vmatpush1.msra.mxu0 %v66
    %131 = vmatprep.mubr.f32.mxu0 %v28
    %132 = vmatmul.mubr.f32.gmra.mrb[0].mxu0 %v27
    %v133 = vpop.f32.mrb[0].mxu0
    %v134 = vadd.f32 0.0, %v133
    %v135 = vpop.f32.mrb[0].mxu0
    %136 = vmatprep.mubr.f32.mxu0 %v30
    %137 = vmatmul.mubr.f32.gmra.mrb[0].mxu0 %v29
    %v138 = vpop.f32.mrb[0].mxu0
    %v139 = vadd.f32 0.0, %v138
    %v140 = vpop.f32.mrb[0].mxu0
    %141 = vdwg.mxu0
    %v142 = vld [vmem:[%s3] sm:$0xff]
    %v143 = vld [vmem:[%s4] sm:$0xff]
    %v144 = vld [vmem:[%s4 + $0x8] sm:$0xff]
    %v145 = vld [vmem:[%s2] sm:$0xff]
    %v146 = vld [vmem:[%s2 + $0x8] sm:$0xff]
    %v147 = vld [vmem:[%s2 + $0x10] sm:$0xff]
    %v148 = vld [vmem:[%s2 + $0x18] sm:$0xff]
    %v149 = vld [vmem:[%s2 + $0x20] sm:$0xff]
    %v150 = vld [vmem:[%s2 + $0x28] sm:$0xff]
    %v151 = vld [vmem:[%s2 + $0x30] sm:$0xff]
    %v152 = vld [vmem:[%s2 + $0x38] sm:$0xff]
    %v153 = vld [vmem:[%s2 + $0x40] sm:$0xf]
    %v154 = vld [vmem:[%s2 + $0x48] sm:$0xf]
    %vm155 = vcmask 64512
    %v157 = vsel %vm155, %v142, 0
    %159 = vmatprep.subr.mxu0 0.0
    %160 = vmatpush1.msra.mxu0 %v134
    %161 = vmatprep.subr.mxu0 0.0
    %162 = vmatpush1.msra.mxu0 0.0
    %163 = vmatprep.subr.mxu0 0.0
    %164 = vmatpush1.msra.mxu0 0.0
    %165 = vmatprep.subr.mxu0 0.0
    %166 = vmatpush1.msra.mxu0 0.0
    %167 = vmatprep.subr.mxu0 0.0
    %168 = vmatpush1.msra.mxu0 0.0
    %169 = vmatprep.subr.mxu0 0.0
    %170 = vmatpush1.msra.mxu0 0.0
    %171 = vmatprep.subr.mxu0 0.0
    %172 = vmatpush1.msra.mxu0 0.0
    %173 = vmatprep.subr.mxu0 0.0
    %174 = vmatpush1.msra.mxu0 0.0
    %175 = vmatprep.subr.mxu0 0.0
    %176 = vmatpush1.msra.mxu0 0.0
    %177 = vmatprep.subr.mxu0 0.0
    %178 = vmatpush1.msra.mxu0 0.0
    %179 = vmatprep.subr.mxu0 0.0
    %180 = vmatpush1.msra.mxu0 0.0
    %181 = vmatprep.subr.mxu0 0.0
    %182 = vmatpush1.msra.mxu0 0.0
    %183 = vmatprep.subr.mxu0 0.0
    %184 = vmatpush1.msra.mxu0 0.0
    %185 = vmatprep.subr.mxu0 0.0
    %186 = vmatpush1.msra.mxu0 0.0
    %187 = vmatprep.subr.mxu0 0.0
    %188 = vmatpush1.msra.mxu0 0.0
    %189 = vmatprep.subr.mxu0 0.0
    %190 = vmatpush1.msra.mxu0 0.0
    %191 = vmatprep.subr.mxu0 0.0
    %192 = vmatpush1.msra.mxu0 0.0
    %193 = vmatprep.subr.mxu0 0.0
    %194 = vmatpush1.msra.mxu0 0.0
    %195 = vmatprep.subr.mxu0 0.0
    %196 = vmatpush1.msra.mxu0 0.0
    %197 = vmatprep.subr.mxu0 0.0
    %198 = vmatpush1.msra.mxu0 0.0
    %199 = vmatprep.subr.mxu0 0.0
    %200 = vmatpush1.msra.mxu0 0.0
    %201 = vmatprep.subr.mxu0 0.0
    %202 = vmatpush1.msra.mxu0 0.0
    %203 = vmatprep.subr.mxu0 0.0
    %204 = vmatpush1.msra.mxu0 0.0
    %205 = vmatprep.subr.mxu0 0.0
    %206 = vmatpush1.msra.mxu0 0.0
    %207 = vmatprep.subr.mxu0 0.0
    %208 = vmatpush1.msra.mxu0 0.0
    %209 = vmatprep.subr.mxu0 0.0
    %210 = vmatpush1.msra.mxu0 0.0
    %211 = vmatprep.subr.mxu0 0.0
    %212 = vmatpush1.msra.mxu0 0.0
    %213 = vmatprep.subr.mxu0 0.0
    %214 = vmatpush1.msra.mxu0 0.0
    %215 = vmatprep.subr.mxu0 0.0
    %216 = vmatpush1.msra.mxu0 0.0
    %217 = vmatprep.subr.mxu0 0.0
    %218 = vmatpush1.msra.mxu0 0.0
    %219 = vmatprep.subr.mxu0 0.0
    %220 = vmatpush1.msra.mxu0 0.0
    %221 = vmatprep.subr.mxu0 0.0
    %222 = vmatpush1.msra.mxu0 0.0
    %223 = vmatprep.mubr.f32.mxu0 0.0
    %224 = vmatmul.mubr.f32.gmra.mrb[0].mxu0 %v157
    %v225 = vpop.f32.mrb[0].mxu0
    %v226 = vadd.f32 0.0, %v225
    %v227 = vpop.f32.mrb[0].mxu0
    %228 = vdwg.mxu0
    %v230 = vsel %vm155, %v143, 0
    %v233 = vsel %vm155, %v144, 0
    %235 = vmatprep.subr.mxu0 0.0
    %236 = vmatpush1.msra.mxu0 %v226
    %237 = vmatprep.subr.mxu0 0.0
    %238 = vmatpush1.msra.mxu0 0.0
    %239 = vmatprep.subr.mxu0 0.0
    %240 = vmatpush1.msra.mxu0 0.0
    %241 = vmatprep.subr.mxu0 0.0
    %242 = vmatpush1.msra.mxu0 0.0
    %243 = vmatprep.subr.mxu0 0.0
    %244 = vmatpush1.msra.mxu0 0.0
    %245 = vmatprep.subr.mxu0 0.0
    %246 = vmatpush1.msra.mxu0 0.0
    %247 = vmatprep.subr.mxu0 0.0
    %248 = vmatpush1.msra.mxu0 0.0
    %249 = vmatprep.subr.mxu0 0.0
    %250 = vmatpush1.msra.mxu0 0.0
    %251 = vmatprep.subr.mxu0 0.0
    %252 = vmatpush1.msra.mxu0 0.0
    %253 = vmatprep.subr.mxu0 0.0
    %254 = vmatpush1.msra.mxu0 0.0
    %255 = vmatprep.subr.mxu0 0.0
    %256 = vmatpush1.msra.mxu0 0.0
    %257 = vmatprep.subr.mxu0 0.0
    %258 = vmatpush1.msra.mxu0 0.0
    %259 = vmatprep.subr.mxu0 0.0
    %260 = vmatpush1.msra.mxu0 0.0
    %261 = vmatprep.subr.mxu0 0.0
    %262 = vmatpush1.msra.mxu0 0.0
    %263 = vmatprep.subr.mxu0 0.0
    %264 = vmatpush1.msra.mxu0 0.0
    %265 = vmatprep.subr.mxu0 0.0
    %266 = vmatpush1.msra.mxu0 0.0
    %267 = vmatprep.subr.mxu0 0.0
    %268 = vmatpush1.msra.mxu0 0.0
    %269 = vmatprep.subr.mxu0 0.0
    %270 = vmatpush1.msra.mxu0 0.0
    %271 = vmatprep.subr.mxu0 0.0
    %272 = vmatpush1.msra.mxu0 0.0
    %273 = vmatprep.subr.mxu0 0.0
    %274 = vmatpush1.msra.mxu0 0.0
    %275 = vmatprep.subr.mxu0 0.0
    %276 = vmatpush1.msra.mxu0 0.0
    %277 = vmatprep.subr.mxu0 0.0
    %278 = vmatpush1.msra.mxu0 0.0
    %279 = vmatprep.subr.mxu0 0.0
    %280 = vmatpush1.msra.mxu0 0.0
    %281 = vmatprep.subr.mxu0 0.0
    %282 = vmatpush1.msra.mxu0 0.0
    %283 = vmatprep.subr.mxu0 0.0
    %284 = vmatpush1.msra.mxu0 0.0
    %285 = vmatprep.subr.mxu0 0.0
    %286 = vmatpush1.msra.mxu0 0.0
    %287 = vmatprep.subr.mxu0 0.0
    %288 = vmatpush1.msra.mxu0 0.0
    %289 = vmatprep.subr.mxu0 0.0
    %290 = vmatpush1.msra.mxu0 0.0
    %291 = vmatprep.subr.mxu0 0.0
    %292 = vmatpush1.msra.mxu0 0.0
    %293 = vmatprep.subr.mxu0 0.0
    %294 = vmatpush1.msra.mxu0 0.0
    %295 = vmatprep.subr.mxu0 0.0
    %296 = vmatpush1.msra.mxu0 0.0
    %297 = vmatprep.subr.mxu0 0.0
    %298 = vmatpush1.msra.mxu0 0.0
    %299 = vmatprep.mubr.f32.mxu0 0.0
    %300 = vmatmul.mubr.f32.gmra.mrb[0].mxu0 %v230
    %v301 = vpop.f32.mrb[0].mxu0
    %v302 = vadd.f32 0.0, %v301
    %v303 = vpop.f32.mrb[0].mxu0
    %304 = vmatprep.mubr.f32.mxu0 0.0
    %305 = vmatmul.mubr.f32.gmra.mrb[0].mxu0 %v233
    %v306 = vpop.f32.mrb[0].mxu0
    %v307 = vadd.f32 0.0, %v306
    %v308 = vpop.f32.mrb[0].mxu0
    %309 = vdwg.mxu0
    %vm310 = vcmask 293888
    %v312 = vsel %vm310, %v302, 0
    %v315 = vsel %vm310, %v307, 0
    %vm317 = vcmask 1043456
    %v319 = vsel %vm317, %v153, 0
    %v322 = vsel %vm317, %v154, 0
    %324 = vmatprep.subr.mxu0 %v146
    %325 = vmatpush1.msra.mxu0 %v145
    %326 = vmatprep.subr.mxu0 %v148
    %327 = vmatpush1.msra.mxu0 %v147
    %328 = vmatprep.subr.mxu0 %v150
    %329 = vmatpush1.msra.mxu0 %v149
    %330 = vmatprep.subr.mxu0 %v152
    %331 = vmatpush1.msra.mxu0 %v151
    %332 = vmatprep.subr.mxu0 %v322
    %333 = vmatpush1.msra.mxu0 %v319
    %334 = vmatprep.subr.mxu0 0.0
    %335 = vmatpush1.msra.mxu0 0.0
    %336 = vmatprep.subr.mxu0 0.0
    %337 = vmatpush1.msra.mxu0 0.0
    %338 = vmatprep.subr.mxu0 0.0
    %339 = vmatpush1.msra.mxu0 0.0
    %340 = vmatprep.subr.mxu0 0.0
    %341 = vmatpush1.msra.mxu0 0.0
    %342 = vmatprep.subr.mxu0 0.0
    %343 = vmatpush1.msra.mxu0 0.0
    %344 = vmatprep.subr.mxu0 0.0
    %345 = vmatpush1.msra.mxu0 0.0
    %346 = vmatprep.subr.mxu0 0.0
    %347 = vmatpush1.msra.mxu0 0.0
    %348 = vmatprep.subr.mxu0 0.0
    %349 = vmatpush1.msra.mxu0 0.0
    %350 = vmatprep.subr.mxu0 0.0
    %351 = vmatpush1.msra.mxu0 0.0
    %352 = vmatprep.subr.mxu0 0.0
    %353 = vmatpush1.msra.mxu0 0.0
    %354 = vmatprep.subr.mxu0 0.0
    %355 = vmatpush1.msra.mxu0 0.0
    %356 = vmatprep.subr.mxu0 0.0
    %357 = vmatpush1.msra.mxu0 0.0
    %358 = vmatprep.subr.mxu0 0.0
    %359 = vmatpush1.msra.mxu0 0.0
    %360 = vmatprep.subr.mxu0 0.0
    %361 = vmatpush1.msra.mxu0 0.0
    %362 = vmatprep.subr.mxu0 0.0
    %363 = vmatpush1.msra.mxu0 0.0
    %364 = vmatprep.subr.mxu0 0.0
    %365 = vmatpush1.msra.mxu0 0.0
    %366 = vmatprep.subr.mxu0 0.0
    %367 = vmatpush1.msra.mxu0 0.0
    %368 = vmatprep.subr.mxu0 0.0
    %369 = vmatpush1.msra.mxu0 0.0
    %370 = vmatprep.subr.mxu0 0.0
    %371 = vmatpush1.msra.mxu0 0.0
    %372 = vmatprep.subr.mxu0 0.0
    %373 = vmatpush1.msra.mxu0 0.0
    %374 = vmatprep.subr.mxu0 0.0
    %375 = vmatpush1.msra.mxu0 0.0
    %376 = vmatprep.subr.mxu0 0.0
    %377 = vmatpush1.msra.mxu0 0.0
    %378 = vmatprep.subr.mxu0 0.0
    %379 = vmatpush1.msra.mxu0 0.0
    %380 = vmatprep.subr.mxu0 0.0
    %381 = vmatpush1.msra.mxu0 0.0
    %382 = vmatprep.subr.mxu0 0.0
    %383 = vmatpush1.msra.mxu0 0.0
    %384 = vmatprep.subr.mxu0 0.0
    %385 = vmatpush1.msra.mxu0 0.0
    %386 = vmatprep.subr.mxu0 0.0
    %387 = vmatpush1.msra.mxu0 0.0
    %388 = vmatprep.mubr.f32.mxu0 0.0
    %389 = vmatmul.mubr.f32.gmra.mrb[0].mxu0 %v312
    %v390 = vpop.f32.mrb[0].mxu0
    %v391 = vadd.f32 0.0, %v390
    %v392 = vpop.f32.mrb[0].mxu0
    %v393 = vadd.f32 0.0, %v392
    %394 = vmatprep.mubr.f32.mxu0 0.0
    %395 = vmatmul.mubr.f32.gmra.mrb[0].mxu0 %v315
    %v396 = vpop.f32.mrb[0].mxu0
    %v397 = vadd.f32 0.0, %v396
    %v398 = vpop.f32.mrb[0].mxu0
    %v399 = vadd.f32 0.0, %v398
    %400 = vdwg.mxu0
    %v402 = vsel %vm155, %v31, 0
    %v405 = vsel %vm155, %v32, 0
    %407 = vmatprep.subr.mxu0 %v28
    %408 = vmatpush1.msra.mxu0 %v27
    %409 = vmatprep.subr.mxu0 0.0
    %410 = vmatpush1.msra.mxu0 0.0
    %411 = vmatprep.subr.mxu0 0.0
    %412 = vmatpush1.msra.mxu0 0.0
    %413 = vmatprep.subr.mxu0 0.0
    %414 = vmatpush1.msra.mxu0 0.0
    %415 = vmatprep.subr.mxu0 0.0
    %416 = vmatpush1.msra.mxu0 0.0
    %417 = vmatprep.subr.mxu0 0.0
    %418 = vmatpush1.msra.mxu0 0.0
    %419 = vmatprep.subr.mxu0 0.0
    %420 = vmatpush1.msra.mxu0 0.0
    %421 = vmatprep.subr.mxu0 0.0
    %422 = vmatpush1.msra.mxu0 0.0
    %423 = vmatprep.subr.mxu0 0.0
    %424 = vmatpush1.msra.mxu0 0.0
    %425 = vmatprep.subr.mxu0 0.0
    %426 = vmatpush1.msra.mxu0 0.0
    %427 = vmatprep.subr.mxu0 0.0
    %428 = vmatpush1.msra.mxu0 0.0
    %429 = vmatprep.subr.mxu0 0.0
    %430 = vmatpush1.msra.mxu0 0.0
    %431 = vmatprep.subr.mxu0 0.0
    %432 = vmatpush1.msra.mxu0 0.0
    %433 = vmatprep.subr.mxu0 0.0
    %434 = vmatpush1.msra.mxu0 0.0
    %435 = vmatprep.subr.mxu0 0.0
    %436 = vmatpush1.msra.mxu0 0.0
    %437 = vmatprep.subr.mxu0 0.0
    %438 = vmatpush1.msra.mxu0 0.0
    %439 = vmatprep.subr.mxu0 0.0
    %440 = vmatpush1.msra.mxu0 0.0
    %441 = vmatprep.subr.mxu0 0.0
    %442 = vmatpush1.msra.mxu0 0.0
    %443 = vmatprep.subr.mxu0 0.0
    %444 = vmatpush1.msra.mxu0 0.0
    %445 = vmatprep.subr.mxu0 0.0
    %446 = vmatpush1.msra.mxu0 0.0
    %447 = vmatprep.subr.mxu0 0.0
    %448 = vmatpush1.msra.mxu0 0.0
    %449 = vmatprep.subr.mxu0 0.0
    %450 = vmatpush1.msra.mxu0 0.0
    %451 = vmatprep.subr.mxu0 0.0
    %452 = vmatpush1.msra.mxu0 0.0
    %453 = vmatprep.subr.mxu0 0.0
    %454 = vmatpush1.msra.mxu0 0.0
    %455 = vmatprep.subr.mxu0 0.0
    %456 = vmatpush1.msra.mxu0 0.0
    %457 = vmatprep.subr.mxu0 0.0
    %458 = vmatpush1.msra.mxu0 0.0
    %459 = vmatprep.subr.mxu0 0.0
    %460 = vmatpush1.msra.mxu0 0.0
    %461 = vmatprep.subr.mxu0 0.0
    %462 = vmatpush1.msra.mxu0 0.0
    %463 = vmatprep.subr.mxu0 0.0
    %464 = vmatpush1.msra.mxu0 0.0
    %465 = vmatprep.subr.mxu0 0.0
    %466 = vmatpush1.msra.mxu0 0.0
    %467 = vmatprep.subr.mxu0 0.0
    %468 = vmatpush1.msra.mxu0 0.0
    %469 = vmatprep.subr.mxu0 0.0
    %470 = vmatpush1.msra.mxu0 0.0
    %471 = vmatprep.mubr.f32.mxu0 0.0
    %472 = vmatmul.mubr.f32.gmra.mrb[0].mxu0 %v402
    %v473 = vpop.f32.mrb[0].mxu0
    %v474 = vadd.f32 %v391, %v473
    %v475 = vpop.f32.mrb[0].mxu0
    %v476 = vadd.f32 %v393, %v475
    %477 = vmatprep.mubr.f32.mxu0 0.0
    %478 = vmatmul.mubr.f32.gmra.mrb[0].mxu0 %v405
    %v479 = vpop.f32.mrb[0].mxu0
    %v480 = vadd.f32 %v397, %v479
    %v481 = vpop.f32.mrb[0].mxu0
    %v482 = vadd.f32 %v399, %v481
    %483 = vdwg.mxu0
    %484 = vmatprep.subr.mxu0 0.0
    %485 = vmatpush1.msra.mxu0 %v139
    %486 = vmatprep.subr.mxu0 0.0
    %487 = vmatpush1.msra.mxu0 0.0
    %488 = vmatprep.subr.mxu0 0.0
    %489 = vmatpush1.msra.mxu0 0.0
    %490 = vmatprep.subr.mxu0 0.0
    %491 = vmatpush1.msra.mxu0 0.0
    %492 = vmatprep.subr.mxu0 0.0
    %493 = vmatpush1.msra.mxu0 0.0
    %494 = vmatprep.subr.mxu0 0.0
    %495 = vmatpush1.msra.mxu0 0.0
    %496 = vmatprep.subr.mxu0 0.0
    %497 = vmatpush1.msra.mxu0 0.0
    %498 = vmatprep.subr.mxu0 0.0
    %499 = vmatpush1.msra.mxu0 0.0
    %500 = vmatprep.subr.mxu0 0.0
    %501 = vmatpush1.msra.mxu0 0.0
    %502 = vmatprep.subr.mxu0 0.0
    %503 = vmatpush1.msra.mxu0 0.0
    %504 = vmatprep.subr.mxu0 0.0
    %505 = vmatpush1.msra.mxu0 0.0
    %506 = vmatprep.subr.mxu0 0.0
    %507 = vmatpush1.msra.mxu0 0.0
    %508 = vmatprep.subr.mxu0 0.0
    %509 = vmatpush1.msra.mxu0 0.0
    %510 = vmatprep.subr.mxu0 0.0
    %511 = vmatpush1.msra.mxu0 0.0
    %512 = vmatprep.subr.mxu0 0.0
    %513 = vmatpush1.msra.mxu0 0.0
    %514 = vmatprep.subr.mxu0 0.0
    %515 = vmatpush1.msra.mxu0 0.0
    %516 = vmatprep.subr.mxu0 0.0
    %517 = vmatpush1.msra.mxu0 0.0
    %518 = vmatprep.subr.mxu0 0.0
    %519 = vmatpush1.msra.mxu0 0.0
    %520 = vmatprep.subr.mxu0 0.0
    %521 = vmatpush1.msra.mxu0 0.0
    %522 = vmatprep.subr.mxu0 0.0
    %523 = vmatpush1.msra.mxu0 0.0
    %524 = vmatprep.subr.mxu0 0.0
    %525 = vmatpush1.msra.mxu0 0.0
    %526 = vmatprep.subr.mxu0 0.0
    %527 = vmatpush1.msra.mxu0 0.0
    %528 = vmatprep.subr.mxu0 0.0
    %529 = vmatpush1.msra.mxu0 0.0
    %530 = vmatprep.subr.mxu0 0.0
    %531 = vmatpush1.msra.mxu0 0.0
    %532 = vmatprep.subr.mxu0 0.0
    %533 = vmatpush1.msra.mxu0 0.0
    %534 = vmatprep.subr.mxu0 0.0
    %535 = vmatpush1.msra.mxu0 0.0
    %536 = vmatprep.subr.mxu0 0.0
    %537 = vmatpush1.msra.mxu0 0.0
    %538 = vmatprep.subr.mxu0 0.0
    %539 = vmatpush1.msra.mxu0 0.0
    %540 = vmatprep.subr.mxu0 0.0
    %541 = vmatpush1.msra.mxu0 0.0
    %542 = vmatprep.subr.mxu0 0.0
    %543 = vmatpush1.msra.mxu0 0.0
    %544 = vmatprep.subr.mxu0 0.0
    %545 = vmatpush1.msra.mxu0 0.0
    %546 = vmatprep.subr.mxu0 0.0
    %547 = vmatpush1.msra.mxu0 0.0
    %548 = vmatprep.mubr.f32.mxu0 0.0
    %549 = vmatmul.mubr.f32.gmra.mrb[0].mxu0 %v157
    %v550 = vpop.f32.mrb[0].mxu0
    %v551 = vadd.f32 0.0, %v550
    %v552 = vpop.f32.mrb[0].mxu0
    %553 = vdwg.mxu0
    %554 = vmatprep.subr.mxu0 0.0
    %555 = vmatpush1.msra.mxu0 %v551
    %556 = vmatprep.subr.mxu0 0.0
    %557 = vmatpush1.msra.mxu0 0.0
    %558 = vmatprep.subr.mxu0 0.0
    %559 = vmatpush1.msra.mxu0 0.0
    %560 = vmatprep.subr.mxu0 0.0
    %561 = vmatpush1.msra.mxu0 0.0
    %562 = vmatprep.subr.mxu0 0.0
    %563 = vmatpush1.msra.mxu0 0.0
    %564 = vmatprep.subr.mxu0 0.0
    %565 = vmatpush1.msra.mxu0 0.0
    %566 = vmatprep.subr.mxu0 0.0
    %567 = vmatpush1.msra.mxu0 0.0
    %568 = vmatprep.subr.mxu0 0.0
    %569 = vmatpush1.msra.mxu0 0.0
    %570 = vmatprep.subr.mxu0 0.0
    %571 = vmatpush1.msra.mxu0 0.0
    %572 = vmatprep.subr.mxu0 0.0
    %573 = vmatpush1.msra.mxu0 0.0
    %574 = vmatprep.subr.mxu0 0.0
    %575 = vmatpush1.msra.mxu0 0.0
    %576 = vmatprep.subr.mxu0 0.0
    %577 = vmatpush1.msra.mxu0 0.0
    %578 = vmatprep.subr.mxu0 0.0
    %579 = vmatpush1.msra.mxu0 0.0
    %580 = vmatprep.subr.mxu0 0.0
    %581 = vmatpush1.msra.mxu0 0.0
    %582 = vmatprep.subr.mxu0 0.0
    %583 = vmatpush1.msra.mxu0 0.0
    %584 = vmatprep.subr.mxu0 0.0
    %585 = vmatpush1.msra.mxu0 0.0
    %586 = vmatprep.subr.mxu0 0.0
    %587 = vmatpush1.msra.mxu0 0.0
    %588 = vmatprep.subr.mxu0 0.0
    %589 = vmatpush1.msra.mxu0 0.0
    %590 = vmatprep.subr.mxu0 0.0
    %591 = vmatpush1.msra.mxu0 0.0
    %592 = vmatprep.subr.mxu0 0.0
    %593 = vmatpush1.msra.mxu0 0.0
    %594 = vmatprep.subr.mxu0 0.0
    %595 = vmatpush1.msra.mxu0 0.0
    %596 = vmatprep.subr.mxu0 0.0
    %597 = vmatpush1.msra.mxu0 0.0
    %598 = vmatprep.subr.mxu0 0.0
    %599 = vmatpush1.msra.mxu0 0.0
    %600 = vmatprep.subr.mxu0 0.0
    %601 = vmatpush1.msra.mxu0 0.0
    %602 = vmatprep.subr.mxu0 0.0
    %603 = vmatpush1.msra.mxu0 0.0
    %604 = vmatprep.subr.mxu0 0.0
    %605 = vmatpush1.msra.mxu0 0.0
    %606 = vmatprep.subr.mxu0 0.0
    %607 = vmatpush1.msra.mxu0 0.0
    %608 = vmatprep.subr.mxu0 0.0
    %609 = vmatpush1.msra.mxu0 0.0
    %610 = vmatprep.subr.mxu0 0.0
    %611 = vmatpush1.msra.mxu0 0.0
    %612 = vmatprep.subr.mxu0 0.0
    %613 = vmatpush1.msra.mxu0 0.0
    %614 = vmatprep.subr.mxu0 0.0
    %615 = vmatpush1.msra.mxu0 0.0
    %616 = vmatprep.subr.mxu0 0.0
    %617 = vmatpush1.msra.mxu0 0.0
    %618 = vmatprep.mubr.f32.mxu0 0.0
    %619 = vmatmul.mubr.f32.gmra.mrb[0].mxu0 %v230
    %v620 = vpop.f32.mrb[0].mxu0
    %v621 = vadd.f32 0.0, %v620
    %v622 = vpop.f32.mrb[0].mxu0
    %623 = vmatprep.mubr.f32.mxu0 0.0
    %624 = vmatmul.mubr.f32.gmra.mrb[0].mxu0 %v233
    %v625 = vpop.f32.mrb[0].mxu0
    %v626 = vadd.f32 0.0, %v625
    %v627 = vpop.f32.mrb[0].mxu0
    %628 = vdwg.mxu0
    %v630 = vsel %vm310, %v621, 0
    %v633 = vsel %vm310, %v626, 0
    %635 = vmatprep.subr.mxu0 %v146
    %636 = vmatpush1.msra.mxu0 %v145
    %637 = vmatprep.subr.mxu0 %v148
    %638 = vmatpush1.msra.mxu0 %v147
    %639 = vmatprep.subr.mxu0 %v150
    %640 = vmatpush1.msra.mxu0 %v149
    %641 = vmatprep.subr.mxu0 %v152
    %642 = vmatpush1.msra.mxu0 %v151
    %643 = vmatprep.subr.mxu0 %v322
    %644 = vmatpush1.msra.mxu0 %v319
    %645 = vmatprep.subr.mxu0 0.0
    %646 = vmatpush1.msra.mxu0 0.0
    %647 = vmatprep.subr.mxu0 0.0
    %648 = vmatpush1.msra.mxu0 0.0
    %649 = vmatprep.subr.mxu0 0.0
    %650 = vmatpush1.msra.mxu0 0.0
    %651 = vmatprep.subr.mxu0 0.0
    %652 = vmatpush1.msra.mxu0 0.0
    %653 = vmatprep.subr.mxu0 0.0
    %654 = vmatpush1.msra.mxu0 0.0
    %655 = vmatprep.subr.mxu0 0.0
    %656 = vmatpush1.msra.mxu0 0.0
    %657 = vmatprep.subr.mxu0 0.0
    %658 = vmatpush1.msra.mxu0 0.0
    %659 = vmatprep.subr.mxu0 0.0
    %660 = vmatpush1.msra.mxu0 0.0
    %661 = vmatprep.subr.mxu0 0.0
    %662 = vmatpush1.msra.mxu0 0.0
    %663 = vmatprep.subr.mxu0 0.0
    %664 = vmatpush1.msra.mxu0 0.0
    %665 = vmatprep.subr.mxu0 0.0
    %666 = vmatpush1.msra.mxu0 0.0
    %667 = vmatprep.subr.mxu0 0.0
    %668 = vmatpush1.msra.mxu0 0.0
    %669 = vmatprep.subr.mxu0 0.0
    %670 = vmatpush1.msra.mxu0 0.0
    %671 = vmatprep.subr.mxu0 0.0
    %672 = vmatpush1.msra.mxu0 0.0
    %673 = vmatprep.subr.mxu0 0.0
    %674 = vmatpush1.msra.mxu0 0.0
    %675 = vmatprep.subr.mxu0 0.0
    %676 = vmatpush1.msra.mxu0 0.0
    %677 = vmatprep.subr.mxu0 0.0
    %678 = vmatpush1.msra.mxu0 0.0
    %679 = vmatprep.subr.mxu0 0.0
    %680 = vmatpush1.msra.mxu0 0.0
    %681 = vmatprep.subr.mxu0 0.0
    %682 = vmatpush1.msra.mxu0 0.0
    %683 = vmatprep.subr.mxu0 0.0
    %684 = vmatpush1.msra.mxu0 0.0
    %685 = vmatprep.subr.mxu0 0.0
    %686 = vmatpush1.msra.mxu0 0.0
    %687 = vmatprep.subr.mxu0 0.0
    %688 = vmatpush1.msra.mxu0 0.0
    %689 = vmatprep.subr.mxu0 0.0
    %690 = vmatpush1.msra.mxu0 0.0
    %691 = vmatprep.subr.mxu0 0.0
    %692 = vmatpush1.msra.mxu0 0.0
    %693 = vmatprep.subr.mxu0 0.0
    %694 = vmatpush1.msra.mxu0 0.0
    %695 = vmatprep.subr.mxu0 0.0
    %696 = vmatpush1.msra.mxu0 0.0
    %697 = vmatprep.subr.mxu0 0.0
    %698 = vmatpush1.msra.mxu0 0.0
    %699 = vmatprep.mubr.f32.mxu0 0.0
    %700 = vmatmul.mubr.f32.gmra.mrb[0].mxu0 %v630
    %v701 = vpop.f32.mrb[0].mxu0
    %v702 = vadd.f32 0.0, %v701
    %v703 = vpop.f32.mrb[0].mxu0
    %v704 = vadd.f32 0.0, %v703
    %705 = vmatprep.mubr.f32.mxu0 0.0
    %706 = vmatmul.mubr.f32.gmra.mrb[0].mxu0 %v633
    %v707 = vpop.f32.mrb[0].mxu0
    %v708 = vadd.f32 0.0, %v707
    %v709 = vpop.f32.mrb[0].mxu0
    %v710 = vadd.f32 0.0, %v709
    %711 = vdwg.mxu0
    %712 = vmatprep.subr.mxu0 %v30
    %713 = vmatpush1.msra.mxu0 %v29
    %714 = vmatprep.subr.mxu0 0.0
    %715 = vmatpush1.msra.mxu0 0.0
    %716 = vmatprep.subr.mxu0 0.0
    %717 = vmatpush1.msra.mxu0 0.0
    %718 = vmatprep.subr.mxu0 0.0
    %719 = vmatpush1.msra.mxu0 0.0
    %720 = vmatprep.subr.mxu0 0.0
    %721 = vmatpush1.msra.mxu0 0.0
    %722 = vmatprep.subr.mxu0 0.0
    %723 = vmatpush1.msra.mxu0 0.0
    %724 = vmatprep.subr.mxu0 0.0
    %725 = vmatpush1.msra.mxu0 0.0
    %726 = vmatprep.subr.mxu0 0.0
    %727 = vmatpush1.msra.mxu0 0.0
    %728 = vmatprep.subr.mxu0 0.0
    %729 = vmatpush1.msra.mxu0 0.0
    %730 = vmatprep.subr.mxu0 0.0
    %731 = vmatpush1.msra.mxu0 0.0
    %732 = vmatprep.subr.mxu0 0.0
    %733 = vmatpush1.msra.mxu0 0.0
    %734 = vmatprep.subr.mxu0 0.0
    %735 = vmatpush1.msra.mxu0 0.0
    %736 = vmatprep.subr.mxu0 0.0
    %737 = vmatpush1.msra.mxu0 0.0
    %738 = vmatprep.subr.mxu0 0.0
    %739 = vmatpush1.msra.mxu0 0.0
    %740 = vmatprep.subr.mxu0 0.0
    %741 = vmatpush1.msra.mxu0 0.0
    %742 = vmatprep.subr.mxu0 0.0
    %743 = vmatpush1.msra.mxu0 0.0
    %744 = vmatprep.subr.mxu0 0.0
    %745 = vmatpush1.msra.mxu0 0.0
    %746 = vmatprep.subr.mxu0 0.0
    %747 = vmatpush1.msra.mxu0 0.0
    %748 = vmatprep.subr.mxu0 0.0
    %749 = vmatpush1.msra.mxu0 0.0
    %750 = vmatprep.subr.mxu0 0.0
    %751 = vmatpush1.msra.mxu0 0.0
    %752 = vmatprep.subr.mxu0 0.0
    %753 = vmatpush1.msra.mxu0 0.0
    %754 = vmatprep.subr.mxu0 0.0
    %755 = vmatpush1.msra.mxu0 0.0
    %756 = vmatprep.subr.mxu0 0.0
    %757 = vmatpush1.msra.mxu0 0.0
    %758 = vmatprep.subr.mxu0 0.0
    %759 = vmatpush1.msra.mxu0 0.0
    %760 = vmatprep.subr.mxu0 0.0
    %761 = vmatpush1.msra.mxu0 0.0
    %762 = vmatprep.subr.mxu0 0.0
    %763 = vmatpush1.msra.mxu0 0.0
    %764 = vmatprep.subr.mxu0 0.0
    %765 = vmatpush1.msra.mxu0 0.0
    %766 = vmatprep.subr.mxu0 0.0
    %767 = vmatpush1.msra.mxu0 0.0
    %768 = vmatprep.subr.mxu0 0.0
    %769 = vmatpush1.msra.mxu0 0.0
    %770 = vmatprep.subr.mxu0 0.0
    %771 = vmatpush1.msra.mxu0 0.0
    %772 = vmatprep.subr.mxu0 0.0
    %773 = vmatpush1.msra.mxu0 0.0
    %774 = vmatprep.subr.mxu0 0.0
    %775 = vmatpush1.msra.mxu0 0.0
    %776 = vmatprep.mubr.f32.mxu0 0.0
    %777 = vmatmul.mubr.f32.gmra.mrb[0].mxu0 %v402
    %v778 = vpop.f32.mrb[0].mxu0
    %v779 = vadd.f32 %v702, %v778
    %v780 = vpop.f32.mrb[0].mxu0
    %v781 = vadd.f32 %v704, %v780
    %782 = vmatprep.mubr.f32.mxu0 0.0
    %783 = vmatmul.mubr.f32.gmra.mrb[0].mxu0 %v405
    %v784 = vpop.f32.mrb[0].mxu0
    %v785 = vadd.f32 %v708, %v784
    %v786 = vpop.f32.mrb[0].mxu0
    %v787 = vadd.f32 %v710, %v786
    %788 = vdwg.mxu0
    %s789 = scalar_lea.vmem %s1, 256
    %v790 = vld [vmem:[%s789] sm:$0xff]
    %v791 = vld [vmem:[%s789 + $0x8] sm:$0xff]
    %v792 = vld [vmem:[%s789 + $0x10] sm:$0xff]
    %v793 = vld [vmem:[%s789 + $0x18] sm:$0xff]
    %v794 = vld [vmem:[%s789 + $0x20] sm:$0xff]
    %v795 = vld [vmem:[%s789 + $0x28] sm:$0xff]
    %v796 = vld [vmem:[%s789 + $0x30] sm:$0xff]
    %v797 = vld [vmem:[%s789 + $0x38] sm:$0xff]
    %v798 = vld [vmem:[%s789 + $0x40] sm:$0xff]
    %v799 = vld [vmem:[%s789 + $0x48] sm:$0xff]
    %v800 = vld [vmem:[%s789 + $0x50] sm:$0xff]
    %v801 = vld [vmem:[%s789 + $0x58] sm:$0xff]
    %v802 = vld [vmem:[%s789 + $0x60] sm:$0xff]
    %v803 = vld [vmem:[%s789 + $0x68] sm:$0xff]
    %v804 = vld [vmem:[%s789 + $0x70] sm:$0xff]
    %v805 = vld [vmem:[%s789 + $0x78] sm:$0xff]
    %v806 = vld [vmem:[%s789 + $0x80] sm:$0xff]
    %v807 = vld [vmem:[%s789 + $0x88] sm:$0xff]
    %v808 = vld [vmem:[%s789 + $0x90] sm:$0xff]
    %v809 = vld [vmem:[%s789 + $0x98] sm:$0xff]
    %v810 = vld [vmem:[%s789 + $0xa0] sm:$0xff]
    %v811 = vld [vmem:[%s789 + $0xa8] sm:$0xff]
    %v812 = vld [vmem:[%s789 + $0xb0] sm:$0xff]
    %v813 = vld [vmem:[%s789 + $0xb8] sm:$0xff]
    %v814 = vld [vmem:[%s789 + $0xc0] sm:$0xff]
    %v815 = vld [vmem:[%s789 + $0xc8] sm:$0xff]
    %v816 = vld [vmem:[%s789 + $0xd0] sm:$0xff]
    %v817 = vld [vmem:[%s789 + $0xd8] sm:$0xff]
    %v818 = vld [vmem:[%s789 + $0xe0] sm:$0xff]
    %v819 = vld [vmem:[%s789 + $0xe8] sm:$0xff]
    %v820 = vld [vmem:[%s789 + $0xf0] sm:$0xff]
    %v821 = vld [vmem:[%s789 + $0xf8] sm:$0xff]
    %822 = vmatprep.subr.mxu0 0.0
    %823 = vmatpush1.msra.mxu0 %v790
    %824 = vmatprep.subr.mxu0 0.0
    %825 = vmatpush1.msra.mxu0 %v791
    %826 = vmatprep.subr.mxu0 0.0
    %827 = vmatpush1.msra.mxu0 %v792
    %828 = vmatprep.subr.mxu0 0.0
    %829 = vmatpush1.msra.mxu0 %v793
    %830 = vmatprep.subr.mxu0 0.0
    %831 = vmatpush1.msra.mxu0 %v794
    %832 = vmatprep.subr.mxu0 0.0
    %833 = vmatpush1.msra.mxu0 %v795
    %834 = vmatprep.subr.mxu0 0.0
    %835 = vmatpush1.msra.mxu0 %v796
    %836 = vmatprep.subr.mxu0 0.0
    %837 = vmatpush1.msra.mxu0 %v797
    %838 = vmatprep.subr.mxu0 0.0
    %839 = vmatpush1.msra.mxu0 %v798
    %840 = vmatprep.subr.mxu0 0.0
    %841 = vmatpush1.msra.mxu0 %v799
    %842 = vmatprep.subr.mxu0 0.0
    %843 = vmatpush1.msra.mxu0 %v800
    %844 = vmatprep.subr.mxu0 0.0
    %845 = vmatpush1.msra.mxu0 %v801
    %846 = vmatprep.subr.mxu0 0.0
    %847 = vmatpush1.msra.mxu0 %v802
    %848 = vmatprep.subr.mxu0 0.0
    %849 = vmatpush1.msra.mxu0 %v803
    %850 = vmatprep.subr.mxu0 0.0
    %851 = vmatpush1.msra.mxu0 %v804
    %852 = vmatprep.subr.mxu0 0.0
    %853 = vmatpush1.msra.mxu0 %v805
    %854 = vmatprep.subr.mxu0 0.0
    %855 = vmatpush1.msra.mxu0 %v806
    %856 = vmatprep.subr.mxu0 0.0
    %857 = vmatpush1.msra.mxu0 %v807
    %858 = vmatprep.subr.mxu0 0.0
    %859 = vmatpush1.msra.mxu0 %v808
    %860 = vmatprep.subr.mxu0 0.0
    %861 = vmatpush1.msra.mxu0 %v809
    %862 = vmatprep.subr.mxu0 0.0
    %863 = vmatpush1.msra.mxu0 %v810
    %864 = vmatprep.subr.mxu0 0.0
    %865 = vmatpush1.msra.mxu0 %v811
    %866 = vmatprep.subr.mxu0 0.0
    %867 = vmatpush1.msra.mxu0 %v812
    %868 = vmatprep.subr.mxu0 0.0
    %869 = vmatpush1.msra.mxu0 %v813
    %870 = vmatprep.subr.mxu0 0.0
    %871 = vmatpush1.msra.mxu0 %v814
    %872 = vmatprep.subr.mxu0 0.0
    %873 = vmatpush1.msra.mxu0 %v815
    %874 = vmatprep.subr.mxu0 0.0
    %875 = vmatpush1.msra.mxu0 %v816
    %876 = vmatprep.subr.mxu0 0.0
    %877 = vmatpush1.msra.mxu0 %v817
    %878 = vmatprep.subr.mxu0 0.0
    %879 = vmatpush1.msra.mxu0 %v818
    %880 = vmatprep.subr.mxu0 0.0
    %881 = vmatpush1.msra.mxu0 %v819
    %882 = vmatprep.subr.mxu0 0.0
    %883 = vmatpush1.msra.mxu0 %v820
    %884 = vmatprep.subr.mxu0 0.0
    %885 = vmatpush1.msra.mxu0 %v821
    %886 = vmatprep.mubr.f32.mxu0 %v28
    %887 = vmatmul.mubr.f32.gmra.mrb[0].mxu0 %v27
    %v888 = vpop.f32.mrb[0].mxu0
    %v889 = vadd.f32 0.0, %v888
    %v890 = vpop.f32.mrb[0].mxu0
    %891 = vmatprep.mubr.f32.mxu0 %v30
    %892 = vmatmul.mubr.f32.gmra.mrb[0].mxu0 %v29
    %v893 = vpop.f32.mrb[0].mxu0
    %v894 = vadd.f32 0.0, %v893
    %v895 = vpop.f32.mrb[0].mxu0
    %896 = vdwg.mxu0
    %s897 = scalar_lea.vmem %s3, 8
    %v898 = vld [vmem:[%s897] sm:$0xff]
    %s899 = scalar_lea.vmem %s4, 16
    %v900 = vld [vmem:[%s899] sm:$0xff]
    %v901 = vld [vmem:[%s899 + $0x8] sm:$0xff]
    %s902 = scalar_lea.vmem %s2, 80
    %v903 = vld [vmem:[%s902] sm:$0xff]
    %v904 = vld [vmem:[%s902 + $0x8] sm:$0xff]
    %v905 = vld [vmem:[%s902 + $0x10] sm:$0xff]
    %v906 = vld [vmem:[%s902 + $0x18] sm:$0xff]
    %v907 = vld [vmem:[%s902 + $0x20] sm:$0xff]
    %v908 = vld [vmem:[%s902 + $0x28] sm:$0xff]
    %v909 = vld [vmem:[%s902 + $0x30] sm:$0xff]
    %v910 = vld [vmem:[%s902 + $0x38] sm:$0xff]
    %v911 = vld [vmem:[%s902 + $0x40] sm:$0xf]
    %v912 = vld [vmem:[%s902 + $0x48] sm:$0xf]
    %v914 = vsel %vm155, %v898, 0
    %916 = vmatprep.subr.mxu0 0.0
    %917 = vmatpush1.msra.mxu0 %v889
    %918 = vmatprep.subr.mxu0 0.0
    %919 = vmatpush1.msra.mxu0 0.0
    %920 = vmatprep.subr.mxu0 0.0
    %921 = vmatpush1.msra.mxu0 0.0
    %922 = vmatprep.subr.mxu0 0.0
    %923 = vmatpush1.msra.mxu0 0.0
    %924 = vmatprep.subr.mxu0 0.0
    %925 = vmatpush1.msra.mxu0 0.0
    %926 = vmatprep.subr.mxu0 0.0
    %927 = vmatpush1.msra.mxu0 0.0
    %928 = vmatprep.subr.mxu0 0.0
    %929 = vmatpush1.msra.mxu0 0.0
    %930 = vmatprep.subr.mxu0 0.0
    %931 = vmatpush1.msra.mxu0 0.0
    %932 = vmatprep.subr.mxu0 0.0
    %933 = vmatpush1.msra.mxu0 0.0
    %934 = vmatprep.subr.mxu0 0.0
    %935 = vmatpush1.msra.mxu0 0.0
    %936 = vmatprep.subr.mxu0 0.0
    %937 = vmatpush1.msra.mxu0 0.0
    %938 = vmatprep.subr.mxu0 0.0
    %939 = vmatpush1.msra.mxu0 0.0
    %940 = vmatprep.subr.mxu0 0.0
    %941 = vmatpush1.msra.mxu0 0.0
    %942 = vmatprep.subr.mxu0 0.0
    %943 = vmatpush1.msra.mxu0 0.0
    %944 = vmatprep.subr.mxu0 0.0
    %945 = vmatpush1.msra.mxu0 0.0
    %946 = vmatprep.subr.mxu0 0.0
    %947 = vmatpush1.msra.mxu0 0.0
    %948 = vmatprep.subr.mxu0 0.0
    %949 = vmatpush1.msra.mxu0 0.0
    %950 = vmatprep.subr.mxu0 0.0
    %951 = vmatpush1.msra.mxu0 0.0
    %952 = vmatprep.subr.mxu0 0.0
    %953 = vmatpush1.msra.mxu0 0.0
    %954 = vmatprep.subr.mxu0 0.0
    %955 = vmatpush1.msra.mxu0 0.0
    %956 = vmatprep.subr.mxu0 0.0
    %957 = vmatpush1.msra.mxu0 0.0
    %958 = vmatprep.subr.mxu0 0.0
    %959 = vmatpush1.msra.mxu0 0.0
    %960 = vmatprep.subr.mxu0 0.0
    %961 = vmatpush1.msra.mxu0 0.0
    %962 = vmatprep.subr.mxu0 0.0
    %963 = vmatpush1.msra.mxu0 0.0
    %964 = vmatprep.subr.mxu0 0.0
    %965 = vmatpush1.msra.mxu0 0.0
    %966 = vmatprep.subr.mxu0 0.0
    %967 = vmatpush1.msra.mxu0 0.0
    %968 = vmatprep.subr.mxu0 0.0
    %969 = vmatpush1.msra.mxu0 0.0
    %970 = vmatprep.subr.mxu0 0.0
    %971 = vmatpush1.msra.mxu0 0.0
    %972 = vmatprep.subr.mxu0 0.0
    %973 = vmatpush1.msra.mxu0 0.0
    %974 = vmatprep.subr.mxu0 0.0
    %975 = vmatpush1.msra.mxu0 0.0
    %976 = vmatprep.subr.mxu0 0.0
    %977 = vmatpush1.msra.mxu0 0.0
    %978 = vmatprep.subr.mxu0 0.0
    %979 = vmatpush1.msra.mxu0 0.0
    %980 = vmatprep.mubr.f32.mxu0 0.0
    %981 = vmatmul.mubr.f32.gmra.mrb[0].mxu0 %v914
    %v982 = vpop.f32.mrb[0].mxu0
    %v983 = vadd.f32 0.0, %v982
    %v984 = vpop.f32.mrb[0].mxu0
    %985 = vdwg.mxu0
    %v987 = vsel %vm155, %v900, 0
    %v990 = vsel %vm155, %v901, 0
    %992 = vmatprep.subr.mxu0 0.0
    %993 = vmatpush1.msra.mxu0 %v983
    %994 = vmatprep.subr.mxu0 0.0
    %995 = vmatpush1.msra.mxu0 0.0
    %996 = vmatprep.subr.mxu0 0.0
    %997 = vmatpush1.msra.mxu0 0.0
    %998 = vmatprep.subr.mxu0 0.0
    %999 = vmatpush1.msra.mxu0 0.0
    %1000 = vmatprep.subr.mxu0 0.0
    %1001 = vmatpush1.msra.mxu0 0.0
    %1002 = vmatprep.subr.mxu0 0.0
    %1003 = vmatpush1.msra.mxu0 0.0
    %1004 = vmatprep.subr.mxu0 0.0
    %1005 = vmatpush1.msra.mxu0 0.0
    %1006 = vmatprep.subr.mxu0 0.0
    %1007 = vmatpush1.msra.mxu0 0.0
    %1008 = vmatprep.subr.mxu0 0.0
    %1009 = vmatpush1.msra.mxu0 0.0
    %1010 = vmatprep.subr.mxu0 0.0
    %1011 = vmatpush1.msra.mxu0 0.0
    %1012 = vmatprep.subr.mxu0 0.0
    %1013 = vmatpush1.msra.mxu0 0.0
    %1014 = vmatprep.subr.mxu0 0.0
    %1015 = vmatpush1.msra.mxu0 0.0
    %1016 = vmatprep.subr.mxu0 0.0
    %1017 = vmatpush1.msra.mxu0 0.0
    %1018 = vmatprep.subr.mxu0 0.0
    %1019 = vmatpush1.msra.mxu0 0.0
    %1020 = vmatprep.subr.mxu0 0.0
    %1021 = vmatpush1.msra.mxu0 0.0
    %1022 = vmatprep.subr.mxu0 0.0
    %1023 = vmatpush1.msra.mxu0 0.0
    %1024 = vmatprep.subr.mxu0 0.0
    %1025 = vmatpush1.msra.mxu0 0.0
    %1026 = vmatprep.subr.mxu0 0.0
    %1027 = vmatpush1.msra.mxu0 0.0
    %1028 = vmatprep.subr.mxu0 0.0
    %1029 = vmatpush1.msra.mxu0 0.0
    %1030 = vmatprep.subr.mxu0 0.0
    %1031 = vmatpush1.msra.mxu0 0.0
    %1032 = vmatprep.subr.mxu0 0.0
    %1033 = vmatpush1.msra.mxu0 0.0
    %1034 = vmatprep.subr.mxu0 0.0
    %1035 = vmatpush1.msra.mxu0 0.0
    %1036 = vmatprep.subr.mxu0 0.0
    %1037 = vmatpush1.msra.mxu0 0.0
    %1038 = vmatprep.subr.mxu0 0.0
    %1039 = vmatpush1.msra.mxu0 0.0
    %1040 = vmatprep.subr.mxu0 0.0
    %1041 = vmatpush1.msra.mxu0 0.0
    %1042 = vmatprep.subr.mxu0 0.0
    %1043 = vmatpush1.msra.mxu0 0.0
    %1044 = vmatprep.subr.mxu0 0.0
    %1045 = vmatpush1.msra.mxu0 0.0
    %1046 = vmatprep.subr.mxu0 0.0
    %1047 = vmatpush1.msra.mxu0 0.0
    %1048 = vmatprep.subr.mxu0 0.0
    %1049 = vmatpush1.msra.mxu0 0.0
    %1050 = vmatprep.subr.mxu0 0.0
    %1051 = vmatpush1.msra.mxu0 0.0
    %1052 = vmatprep.subr.mxu0 0.0
    %1053 = vmatpush1.msra.mxu0 0.0
    %1054 = vmatprep.subr.mxu0 0.0
    %1055 = vmatpush1.msra.mxu0 0.0
    %1056 = vmatprep.mubr.f32.mxu0 0.0
    %1057 = vmatmul.mubr.f32.gmra.mrb[0].mxu0 %v987
    %v1058 = vpop.f32.mrb[0].mxu0
    %v1059 = vadd.f32 0.0, %v1058
    %v1060 = vpop.f32.mrb[0].mxu0
    %1061 = vmatprep.mubr.f32.mxu0 0.0
    %1062 = vmatmul.mubr.f32.gmra.mrb[0].mxu0 %v990
    %v1063 = vpop.f32.mrb[0].mxu0
    %v1064 = vadd.f32 0.0, %v1063
    %v1065 = vpop.f32.mrb[0].mxu0
    %1066 = vdwg.mxu0
    %v1068 = vsel %vm310, %v1059, 0
    %v1071 = vsel %vm310, %v1064, 0
    %v1074 = vsel %vm317, %v911, 0
    %v1077 = vsel %vm317, %v912, 0
    %1079 = vmatprep.subr.mxu0 %v904
    %1080 = vmatpush1.msra.mxu0 %v903
    %1081 = vmatprep.subr.mxu0 %v906
    %1082 = vmatpush1.msra.mxu0 %v905
    %1083 = vmatprep.subr.mxu0 %v908
    %1084 = vmatpush1.msra.mxu0 %v907
    %1085 = vmatprep.subr.mxu0 %v910
    %1086 = vmatpush1.msra.mxu0 %v909
    %1087 = vmatprep.subr.mxu0 %v1077
    %1088 = vmatpush1.msra.mxu0 %v1074
    %1089 = vmatprep.subr.mxu0 0.0
    %1090 = vmatpush1.msra.mxu0 0.0
    %1091 = vmatprep.subr.mxu0 0.0
    %1092 = vmatpush1.msra.mxu0 0.0
    %1093 = vmatprep.subr.mxu0 0.0
    %1094 = vmatpush1.msra.mxu0 0.0
    %1095 = vmatprep.subr.mxu0 0.0
    %1096 = vmatpush1.msra.mxu0 0.0
    %1097 = vmatprep.subr.mxu0 0.0
    %1098 = vmatpush1.msra.mxu0 0.0
    %1099 = vmatprep.subr.mxu0 0.0
    %1100 = vmatpush1.msra.mxu0 0.0
    %1101 = vmatprep.subr.mxu0 0.0
    %1102 = vmatpush1.msra.mxu0 0.0
    %1103 = vmatprep.subr.mxu0 0.0
    %1104 = vmatpush1.msra.mxu0 0.0
    %1105 = vmatprep.subr.mxu0 0.0
    %1106 = vmatpush1.msra.mxu0 0.0
    %1107 = vmatprep.subr.mxu0 0.0
    %1108 = vmatpush1.msra.mxu0 0.0
    %1109 = vmatprep.subr.mxu0 0.0
    %1110 = vmatpush1.msra.mxu0 0.0
    %1111 = vmatprep.subr.mxu0 0.0
    %1112 = vmatpush1.msra.mxu0 0.0
    %1113 = vmatprep.subr.mxu0 0.0
    %1114 = vmatpush1.msra.mxu0 0.0
    %1115 = vmatprep.subr.mxu0 0.0
    %1116 = vmatpush1.msra.mxu0 0.0
    %1117 = vmatprep.subr.mxu0 0.0
    %1118 = vmatpush1.msra.mxu0 0.0
    %1119 = vmatprep.subr.mxu0 0.0
    %1120 = vmatpush1.msra.mxu0 0.0
    %1121 = vmatprep.subr.mxu0 0.0
    %1122 = vmatpush1.msra.mxu0 0.0
    %1123 = vmatprep.subr.mxu0 0.0
    %1124 = vmatpush1.msra.mxu0 0.0
    %1125 = vmatprep.subr.mxu0 0.0
    %1126 = vmatpush1.msra.mxu0 0.0
    %1127 = vmatprep.subr.mxu0 0.0
    %1128 = vmatpush1.msra.mxu0 0.0
    %1129 = vmatprep.subr.mxu0 0.0
    %1130 = vmatpush1.msra.mxu0 0.0
    %1131 = vmatprep.subr.mxu0 0.0
    %1132 = vmatpush1.msra.mxu0 0.0
    %1133 = vmatprep.subr.mxu0 0.0
    %1134 = vmatpush1.msra.mxu0 0.0
    %1135 = vmatprep.subr.mxu0 0.0
    %1136 = vmatpush1.msra.mxu0 0.0
    %1137 = vmatprep.subr.mxu0 0.0
    %1138 = vmatpush1.msra.mxu0 0.0
    %1139 = vmatprep.subr.mxu0 0.0
    %1140 = vmatpush1.msra.mxu0 0.0
    %1141 = vmatprep.subr.mxu0 0.0
    %1142 = vmatpush1.msra.mxu0 0.0
    %1143 = vmatprep.mubr.f32.mxu0 0.0
    %1144 = vmatmul.mubr.f32.gmra.mrb[0].mxu0 %v1068
    %v1145 = vpop.f32.mrb[0].mxu0
    %v1146 = vadd.f32 0.0, %v1145
    %v1147 = vpop.f32.mrb[0].mxu0
    %v1148 = vadd.f32 0.0, %v1147
    %1149 = vmatprep.mubr.f32.mxu0 0.0
    %1150 = vmatmul.mubr.f32.gmra.mrb[0].mxu0 %v1071
    %v1151 = vpop.f32.mrb[0].mxu0
    %v1152 = vadd.f32 0.0, %v1151
    %v1153 = vpop.f32.mrb[0].mxu0
    %v1154 = vadd.f32 0.0, %v1153
    %1155 = vdwg.mxu0
    %v1156 = vadd.f32 %v474, %v1146
    %v1157 = vadd.f32 %v476, %v1148
    %v1158 = vadd.f32 %v480, %v1152
    %v1159 = vadd.f32 %v482, %v1154
    %1160 = vmatprep.subr.mxu0 0.0
    %1161 = vmatpush1.msra.mxu0 %v894
    %1162 = vmatprep.subr.mxu0 0.0
    %1163 = vmatpush1.msra.mxu0 0.0
    %1164 = vmatprep.subr.mxu0 0.0
    %1165 = vmatpush1.msra.mxu0 0.0
    %1166 = vmatprep.subr.mxu0 0.0
    %1167 = vmatpush1.msra.mxu0 0.0
    %1168 = vmatprep.subr.mxu0 0.0
    %1169 = vmatpush1.msra.mxu0 0.0
    %1170 = vmatprep.subr.mxu0 0.0
    %1171 = vmatpush1.msra.mxu0 0.0
    %1172 = vmatprep.subr.mxu0 0.0
    %1173 = vmatpush1.msra.mxu0 0.0
    %1174 = vmatprep.subr.mxu0 0.0
    %1175 = vmatpush1.msra.mxu0 0.0
    %1176 = vmatprep.subr.mxu0 0.0
    %1177 = vmatpush1.msra.mxu0 0.0
    %1178 = vmatprep.subr.mxu0 0.0
    %1179 = vmatpush1.msra.mxu0 0.0
    %1180 = vmatprep.subr.mxu0 0.0
    %1181 = vmatpush1.msra.mxu0 0.0
    %1182 = vmatprep.subr.mxu0 0.0
    %1183 = vmatpush1.msra.mxu0 0.0
    %1184 = vmatprep.subr.mxu0 0.0
    %1185 = vmatpush1.msra.mxu0 0.0
    %1186 = vmatprep.subr.mxu0 0.0
    %1187 = vmatpush1.msra.mxu0 0.0
    %1188 = vmatprep.subr.mxu0 0.0
    %1189 = vmatpush1.msra.mxu0 0.0
    %1190 = vmatprep.subr.mxu0 0.0
    %1191 = vmatpush1.msra.mxu0 0.0
    %1192 = vmatprep.subr.mxu0 0.0
    %1193 = vmatpush1.msra.mxu0 0.0
    %1194 = vmatprep.subr.mxu0 0.0
    %1195 = vmatpush1.msra.mxu0 0.0
    %1196 = vmatprep.subr.mxu0 0.0
    %1197 = vmatpush1.msra.mxu0 0.0
    %1198 = vmatprep.subr.mxu0 0.0
    %1199 = vmatpush1.msra.mxu0 0.0
    %1200 = vmatprep.subr.mxu0 0.0
    %1201 = vmatpush1.msra.mxu0 0.0
    %1202 = vmatprep.subr.mxu0 0.0
    %1203 = vmatpush1.msra.mxu0 0.0
    %1204 = vmatprep.subr.mxu0 0.0
    %1205 = vmatpush1.msra.mxu0 0.0
    %1206 = vmatprep.subr.mxu0 0.0
    %1207 = vmatpush1.msra.mxu0 0.0
    %1208 = vmatprep.subr.mxu0 0.0
    %1209 = vmatpush1.msra.mxu0 0.0
    %1210 = vmatprep.subr.mxu0 0.0
    %1211 = vmatpush1.msra.mxu0 0.0
    %1212 = vmatprep.subr.mxu0 0.0
    %1213 = vmatpush1.msra.mxu0 0.0
    %1214 = vmatprep.subr.mxu0 0.0
    %1215 = vmatpush1.msra.mxu0 0.0
    %1216 = vmatprep.subr.mxu0 0.0
    %1217 = vmatpush1.msra.mxu0 0.0
    %1218 = vmatprep.subr.mxu0 0.0
    %1219 = vmatpush1.msra.mxu0 0.0
    %1220 = vmatprep.subr.mxu0 0.0
    %1221 = vmatpush1.msra.mxu0 0.0
    %1222 = vmatprep.subr.mxu0 0.0
    %1223 = vmatpush1.msra.mxu0 0.0
    %1224 = vmatprep.mubr.f32.mxu0 0.0
    %1225 = vmatmul.mubr.f32.gmra.mrb[0].mxu0 %v914
    %v1226 = vpop.f32.mrb[0].mxu0
    %v1227 = vadd.f32 0.0, %v1226
    %v1228 = vpop.f32.mrb[0].mxu0
    %1229 = vdwg.mxu0
    %1230 = vmatprep.subr.mxu0 0.0
    %1231 = vmatpush1.msra.mxu0 %v1227
    %1232 = vmatprep.subr.mxu0 0.0
    %1233 = vmatpush1.msra.mxu0 0.0
    %1234 = vmatprep.subr.mxu0 0.0
    %1235 = vmatpush1.msra.mxu0 0.0
    %1236 = vmatprep.subr.mxu0 0.0
    %1237 = vmatpush1.msra.mxu0 0.0
    %1238 = vmatprep.subr.mxu0 0.0
    %1239 = vmatpush1.msra.mxu0 0.0
    %1240 = vmatprep.subr.mxu0 0.0
    %1241 = vmatpush1.msra.mxu0 0.0
    %1242 = vmatprep.subr.mxu0 0.0
    %1243 = vmatpush1.msra.mxu0 0.0
    %1244 = vmatprep.subr.mxu0 0.0
    %1245 = vmatpush1.msra.mxu0 0.0
    %1246 = vmatprep.subr.mxu0 0.0
    %1247 = vmatpush1.msra.mxu0 0.0
    %1248 = vmatprep.subr.mxu0 0.0
    %1249 = vmatpush1.msra.mxu0 0.0
    %1250 = vmatprep.subr.mxu0 0.0
    %1251 = vmatpush1.msra.mxu0 0.0
    %1252 = vmatprep.subr.mxu0 0.0
    %1253 = vmatpush1.msra.mxu0 0.0
    %1254 = vmatprep.subr.mxu0 0.0
    %1255 = vmatpush1.msra.mxu0 0.0
    %1256 = vmatprep.subr.mxu0 0.0
    %1257 = vmatpush1.msra.mxu0 0.0
    %1258 = vmatprep.subr.mxu0 0.0
    %1259 = vmatpush1.msra.mxu0 0.0
    %1260 = vmatprep.subr.mxu0 0.0
    %1261 = vmatpush1.msra.mxu0 0.0
    %1262 = vmatprep.subr.mxu0 0.0
    %1263 = vmatpush1.msra.mxu0 0.0
    %1264 = vmatprep.subr.mxu0 0.0
    %1265 = vmatpush1.msra.mxu0 0.0
    %1266 = vmatprep.subr.mxu0 0.0
    %1267 = vmatpush1.msra.mxu0 0.0
    %1268 = vmatprep.subr.mxu0 0.0
    %1269 = vmatpush1.msra.mxu0 0.0
    %1270 = vmatprep.subr.mxu0 0.0
    %1271 = vmatpush1.msra.mxu0 0.0
    %1272 = vmatprep.subr.mxu0 0.0
    %1273 = vmatpush1.msra.mxu0 0.0
    %1274 = vmatprep.subr.mxu0 0.0
    %1275 = vmatpush1.msra.mxu0 0.0
    %1276 = vmatprep.subr.mxu0 0.0
    %1277 = vmatpush1.msra.mxu0 0.0
    %1278 = vmatprep.subr.mxu0 0.0
    %1279 = vmatpush1.msra.mxu0 0.0
    %1280 = vmatprep.subr.mxu0 0.0
    %1281 = vmatpush1.msra.mxu0 0.0
    %1282 = vmatprep.subr.mxu0 0.0
    %1283 = vmatpush1.msra.mxu0 0.0
    %1284 = vmatprep.subr.mxu0 0.0
    %1285 = vmatpush1.msra.mxu0 0.0
    %1286 = vmatprep.subr.mxu0 0.0
    %1287 = vmatpush1.msra.mxu0 0.0
    %1288 = vmatprep.subr.mxu0 0.0
    %1289 = vmatpush1.msra.mxu0 0.0
    %1290 = vmatprep.subr.mxu0 0.0
    %1291 = vmatpush1.msra.mxu0 0.0
    %1292 = vmatprep.subr.mxu0 0.0
    %1293 = vmatpush1.msra.mxu0 0.0
    %1294 = vmatprep.mubr.f32.mxu0 0.0
    %1295 = vmatmul.mubr.f32.gmra.mrb[0].mxu0 %v987
    %v1296 = vpop.f32.mrb[0].mxu0
    %v1297 = vadd.f32 0.0, %v1296
    %v1298 = vpop.f32.mrb[0].mxu0
    %1299 = vmatprep.mubr.f32.mxu0 0.0
    %1300 = vmatmul.mubr.f32.gmra.mrb[0].mxu0 %v990
    %v1301 = vpop.f32.mrb[0].mxu0
    %v1302 = vadd.f32 0.0, %v1301
    %v1303 = vpop.f32.mrb[0].mxu0
    %1304 = vdwg.mxu0
    %v1306 = vsel %vm310, %v1297, 0
    %v1309 = vsel %vm310, %v1302, 0
    %1311 = vmatprep.subr.mxu0 %v904
    %1312 = vmatpush1.msra.mxu0 %v903
    %1313 = vmatprep.subr.mxu0 %v906
    %1314 = vmatpush1.msra.mxu0 %v905
    %1315 = vmatprep.subr.mxu0 %v908
    %1316 = vmatpush1.msra.mxu0 %v907
    %1317 = vmatprep.subr.mxu0 %v910
    %1318 = vmatpush1.msra.mxu0 %v909
    %1319 = vmatprep.subr.mxu0 %v1077
    %1320 = vmatpush1.msra.mxu0 %v1074
    %1321 = vmatprep.subr.mxu0 0.0
    %1322 = vmatpush1.msra.mxu0 0.0
    %1323 = vmatprep.subr.mxu0 0.0
    %1324 = vmatpush1.msra.mxu0 0.0
    %1325 = vmatprep.subr.mxu0 0.0
    %1326 = vmatpush1.msra.mxu0 0.0
    %1327 = vmatprep.subr.mxu0 0.0
    %1328 = vmatpush1.msra.mxu0 0.0
    %1329 = vmatprep.subr.mxu0 0.0
    %1330 = vmatpush1.msra.mxu0 0.0
    %1331 = vmatprep.subr.mxu0 0.0
    %1332 = vmatpush1.msra.mxu0 0.0
    %1333 = vmatprep.subr.mxu0 0.0
    %1334 = vmatpush1.msra.mxu0 0.0
    %1335 = vmatprep.subr.mxu0 0.0
    %1336 = vmatpush1.msra.mxu0 0.0
    %1337 = vmatprep.subr.mxu0 0.0
    %1338 = vmatpush1.msra.mxu0 0.0
    %1339 = vmatprep.subr.mxu0 0.0
    %1340 = vmatpush1.msra.mxu0 0.0
    %1341 = vmatprep.subr.mxu0 0.0
    %1342 = vmatpush1.msra.mxu0 0.0
    %1343 = vmatprep.subr.mxu0 0.0
    %1344 = vmatpush1.msra.mxu0 0.0
    %1345 = vmatprep.subr.mxu0 0.0
    %1346 = vmatpush1.msra.mxu0 0.0
    %1347 = vmatprep.subr.mxu0 0.0
    %1348 = vmatpush1.msra.mxu0 0.0
    %1349 = vmatprep.subr.mxu0 0.0
    %1350 = vmatpush1.msra.mxu0 0.0
    %1351 = vmatprep.subr.mxu0 0.0
    %1352 = vmatpush1.msra.mxu0 0.0
    %1353 = vmatprep.subr.mxu0 0.0
    %1354 = vmatpush1.msra.mxu0 0.0
    %1355 = vmatprep.subr.mxu0 0.0
    %1356 = vmatpush1.msra.mxu0 0.0
    %1357 = vmatprep.subr.mxu0 0.0
    %1358 = vmatpush1.msra.mxu0 0.0
    %1359 = vmatprep.subr.mxu0 0.0
    %1360 = vmatpush1.msra.mxu0 0.0
    %1361 = vmatprep.subr.mxu0 0.0
    %1362 = vmatpush1.msra.mxu0 0.0
    %1363 = vmatprep.subr.mxu0 0.0
    %1364 = vmatpush1.msra.mxu0 0.0
    %1365 = vmatprep.subr.mxu0 0.0
    %1366 = vmatpush1.msra.mxu0 0.0
    %1367 = vmatprep.subr.mxu0 0.0
    %1368 = vmatpush1.msra.mxu0 0.0
    %1369 = vmatprep.subr.mxu0 0.0
    %1370 = vmatpush1.msra.mxu0 0.0
    %1371 = vmatprep.subr.mxu0 0.0
    %1372 = vmatpush1.msra.mxu0 0.0
    %1373 = vmatprep.subr.mxu0 0.0
    %1374 = vmatpush1.msra.mxu0 0.0
    %1375 = vmatprep.mubr.f32.mxu0 0.0
    %1376 = vmatmul.mubr.f32.gmra.mrb[0].mxu0 %v1306
    %v1377 = vpop.f32.mrb[0].mxu0
    %v1378 = vadd.f32 0.0, %v1377
    %v1379 = vpop.f32.mrb[0].mxu0
    %v1380 = vadd.f32 0.0, %v1379
    %1381 = vmatprep.mubr.f32.mxu0 0.0
    %1382 = vmatmul.mubr.f32.gmra.mrb[0].mxu0 %v1309
    %v1383 = vpop.f32.mrb[0].mxu0
    %v1384 = vadd.f32 0.0, %v1383
    %v1385 = vpop.f32.mrb[0].mxu0
    %v1386 = vadd.f32 0.0, %v1385
    %1387 = vdwg.mxu0
    %v1388 = vadd.f32 %v779, %v1378
    %v1389 = vadd.f32 %v781, %v1380
    %v1390 = vadd.f32 %v785, %v1384
    %v1391 = vadd.f32 %v787, %v1386
    %s1392 = scalar_lea.vmem %s1, 512
    %v1393 = vld [vmem:[%s1392] sm:$0xff]
    %v1394 = vld [vmem:[%s1392 + $0x8] sm:$0xff]
    %v1395 = vld [vmem:[%s1392 + $0x10] sm:$0xff]
    %v1396 = vld [vmem:[%s1392 + $0x18] sm:$0xff]
    %v1397 = vld [vmem:[%s1392 + $0x20] sm:$0xff]
    %v1398 = vld [vmem:[%s1392 + $0x28] sm:$0xff]
    %v1399 = vld [vmem:[%s1392 + $0x30] sm:$0xff]
    %v1400 = vld [vmem:[%s1392 + $0x38] sm:$0xff]
    %v1401 = vld [vmem:[%s1392 + $0x40] sm:$0xff]
    %v1402 = vld [vmem:[%s1392 + $0x48] sm:$0xff]
    %v1403 = vld [vmem:[%s1392 + $0x50] sm:$0xff]
    %v1404 = vld [vmem:[%s1392 + $0x58] sm:$0xff]
    %v1405 = vld [vmem:[%s1392 + $0x60] sm:$0xff]
    %v1406 = vld [vmem:[%s1392 + $0x68] sm:$0xff]
    %v1407 = vld [vmem:[%s1392 + $0x70] sm:$0xff]
    %v1408 = vld [vmem:[%s1392 + $0x78] sm:$0xff]
    %v1409 = vld [vmem:[%s1392 + $0x80] sm:$0xff]
    %v1410 = vld [vmem:[%s1392 + $0x88] sm:$0xff]
    %v1411 = vld [vmem:[%s1392 + $0x90] sm:$0xff]
    %v1412 = vld [vmem:[%s1392 + $0x98] sm:$0xff]
    %v1413 = vld [vmem:[%s1392 + $0xa0] sm:$0xff]
    %v1414 = vld [vmem:[%s1392 + $0xa8] sm:$0xff]
    %v1415 = vld [vmem:[%s1392 + $0xb0] sm:$0xff]
    %v1416 = vld [vmem:[%s1392 + $0xb8] sm:$0xff]
    %v1417 = vld [vmem:[%s1392 + $0xc0] sm:$0xff]
    %v1418 = vld [vmem:[%s1392 + $0xc8] sm:$0xff]
    %v1419 = vld [vmem:[%s1392 + $0xd0] sm:$0xff]
    %v1420 = vld [vmem:[%s1392 + $0xd8] sm:$0xff]
    %v1421 = vld [vmem:[%s1392 + $0xe0] sm:$0xff]
    %v1422 = vld [vmem:[%s1392 + $0xe8] sm:$0xff]
    %v1423 = vld [vmem:[%s1392 + $0xf0] sm:$0xff]
    %v1424 = vld [vmem:[%s1392 + $0xf8] sm:$0xff]
    %1425 = vmatprep.subr.mxu0 0.0
    %1426 = vmatpush1.msra.mxu0 %v1393
    %1427 = vmatprep.subr.mxu0 0.0
    %1428 = vmatpush1.msra.mxu0 %v1394
    %1429 = vmatprep.subr.mxu0 0.0
    %1430 = vmatpush1.msra.mxu0 %v1395
    %1431 = vmatprep.subr.mxu0 0.0
    %1432 = vmatpush1.msra.mxu0 %v1396
    %1433 = vmatprep.subr.mxu0 0.0
    %1434 = vmatpush1.msra.mxu0 %v1397
    %1435 = vmatprep.subr.mxu0 0.0
    %1436 = vmatpush1.msra.mxu0 %v1398
    %1437 = vmatprep.subr.mxu0 0.0
    %1438 = vmatpush1.msra.mxu0 %v1399
    %1439 = vmatprep.subr.mxu0 0.0
    %1440 = vmatpush1.msra.mxu0 %v1400
    %1441 = vmatprep.subr.mxu0 0.0
    %1442 = vmatpush1.msra.mxu0 %v1401
    %1443 = vmatprep.subr.mxu0 0.0
    %1444 = vmatpush1.msra.mxu0 %v1402
    %1445 = vmatprep.subr.mxu0 0.0
    %1446 = vmatpush1.msra.mxu0 %v1403
    %1447 = vmatprep.subr.mxu0 0.0
    %1448 = vmatpush1.msra.mxu0 %v1404
    %1449 = vmatprep.subr.mxu0 0.0
    %1450 = vmatpush1.msra.mxu0 %v1405
    %1451 = vmatprep.subr.mxu0 0.0
    %1452 = vmatpush1.msra.mxu0 %v1406
    %1453 = vmatprep.subr.mxu0 0.0
    %1454 = vmatpush1.msra.mxu0 %v1407
    %1455 = vmatprep.subr.mxu0 0.0
    %1456 = vmatpush1.msra.mxu0 %v1408
    %1457 = vmatprep.subr.mxu0 0.0
    %1458 = vmatpush1.msra.mxu0 %v1409
    %1459 = vmatprep.subr.mxu0 0.0
    %1460 = vmatpush1.msra.mxu0 %v1410
    %1461 = vmatprep.subr.mxu0 0.0
    %1462 = vmatpush1.msra.mxu0 %v1411
    %1463 = vmatprep.subr.mxu0 0.0
    %1464 = vmatpush1.msra.mxu0 %v1412
    %1465 = vmatprep.subr.mxu0 0.0
    %1466 = vmatpush1.msra.mxu0 %v1413
    %1467 = vmatprep.subr.mxu0 0.0
    %1468 = vmatpush1.msra.mxu0 %v1414
    %1469 = vmatprep.subr.mxu0 0.0
    %1470 = vmatpush1.msra.mxu0 %v1415
    %1471 = vmatprep.subr.mxu0 0.0
    %1472 = vmatpush1.msra.mxu0 %v1416
    %1473 = vmatprep.subr.mxu0 0.0
    %1474 = vmatpush1.msra.mxu0 %v1417
    %1475 = vmatprep.subr.mxu0 0.0
    %1476 = vmatpush1.msra.mxu0 %v1418
    %1477 = vmatprep.subr.mxu0 0.0
    %1478 = vmatpush1.msra.mxu0 %v1419
    %1479 = vmatprep.subr.mxu0 0.0
    %1480 = vmatpush1.msra.mxu0 %v1420
    %1481 = vmatprep.subr.mxu0 0.0
    %1482 = vmatpush1.msra.mxu0 %v1421
    %1483 = vmatprep.subr.mxu0 0.0
    %1484 = vmatpush1.msra.mxu0 %v1422
    %1485 = vmatprep.subr.mxu0 0.0
    %1486 = vmatpush1.msra.mxu0 %v1423
    %1487 = vmatprep.subr.mxu0 0.0
    %1488 = vmatpush1.msra.mxu0 %v1424
    %1489 = vmatprep.mubr.f32.mxu0 %v28
    %1490 = vmatmul.mubr.f32.gmra.mrb[0].mxu0 %v27
    %v1491 = vpop.f32.mrb[0].mxu0
    %v1492 = vadd.f32 0.0, %v1491
    %v1493 = vpop.f32.mrb[0].mxu0
    %1494 = vmatprep.mubr.f32.mxu0 %v30
    %1495 = vmatmul.mubr.f32.gmra.mrb[0].mxu0 %v29
    %v1496 = vpop.f32.mrb[0].mxu0
    %v1497 = vadd.f32 0.0, %v1496
    %v1498 = vpop.f32.mrb[0].mxu0
    %1499 = vdwg.mxu0
    %s1500 = scalar_lea.vmem %s3, 16
    %v1501 = vld [vmem:[%s1500] sm:$0xff]
    %s1502 = scalar_lea.vmem %s4, 32
    %v1503 = vld [vmem:[%s1502] sm:$0xff]
    %v1504 = vld [vmem:[%s1502 + $0x8] sm:$0xff]
    %s1505 = scalar_lea.vmem %s2, 160
    %v1506 = vld [vmem:[%s1505] sm:$0xff]
    %v1507 = vld [vmem:[%s1505 + $0x8] sm:$0xff]
    %v1508 = vld [vmem:[%s1505 + $0x10] sm:$0xff]
    %v1509 = vld [vmem:[%s1505 + $0x18] sm:$0xff]
    %v1510 = vld [vmem:[%s1505 + $0x20] sm:$0xff]
    %v1511 = vld [vmem:[%s1505 + $0x28] sm:$0xff]
    %v1512 = vld [vmem:[%s1505 + $0x30] sm:$0xff]
    %v1513 = vld [vmem:[%s1505 + $0x38] sm:$0xff]
    %v1514 = vld [vmem:[%s1505 + $0x40] sm:$0xf]
    %v1515 = vld [vmem:[%s1505 + $0x48] sm:$0xf]
    %v1517 = vsel %vm155, %v1501, 0
    %1519 = vmatprep.subr.mxu0 0.0
    %1520 = vmatpush1.msra.mxu0 %v1492
    %1521 = vmatprep.subr.mxu0 0.0
    %1522 = vmatpush1.msra.mxu0 0.0
    %1523 = vmatprep.subr.mxu0 0.0
    %1524 = vmatpush1.msra.mxu0 0.0
    %1525 = vmatprep.subr.mxu0 0.0
    %1526 = vmatpush1.msra.mxu0 0.0
    %1527 = vmatprep.subr.mxu0 0.0
    %1528 = vmatpush1.msra.mxu0 0.0
    %1529 = vmatprep.subr.mxu0 0.0
    %1530 = vmatpush1.msra.mxu0 0.0
    %1531 = vmatprep.subr.mxu0 0.0
    %1532 = vmatpush1.msra.mxu0 0.0
    %1533 = vmatprep.subr.mxu0 0.0
    %1534 = vmatpush1.msra.mxu0 0.0
    %1535 = vmatprep.subr.mxu0 0.0
    %1536 = vmatpush1.msra.mxu0 0.0
    %1537 = vmatprep.subr.mxu0 0.0
    %1538 = vmatpush1.msra.mxu0 0.0
    %1539 = vmatprep.subr.mxu0 0.0
    %1540 = vmatpush1.msra.mxu0 0.0
    %1541 = vmatprep.subr.mxu0 0.0
    %1542 = vmatpush1.msra.mxu0 0.0
    %1543 = vmatprep.subr.mxu0 0.0
    %1544 = vmatpush1.msra.mxu0 0.0
    %1545 = vmatprep.subr.mxu0 0.0
    %1546 = vmatpush1.msra.mxu0 0.0
    %1547 = vmatprep.subr.mxu0 0.0
    %1548 = vmatpush1.msra.mxu0 0.0
    %1549 = vmatprep.subr.mxu0 0.0
    %1550 = vmatpush1.msra.mxu0 0.0
    %1551 = vmatprep.subr.mxu0 0.0
    %1552 = vmatpush1.msra.mxu0 0.0
    %1553 = vmatprep.subr.mxu0 0.0
    %1554 = vmatpush1.msra.mxu0 0.0
    %1555 = vmatprep.subr.mxu0 0.0
    %1556 = vmatpush1.msra.mxu0 0.0
    %1557 = vmatprep.subr.mxu0 0.0
    %1558 = vmatpush1.msra.mxu0 0.0
    %1559 = vmatprep.subr.mxu0 0.0
    %1560 = vmatpush1.msra.mxu0 0.0
    %1561 = vmatprep.subr.mxu0 0.0
    %1562 = vmatpush1.msra.mxu0 0.0
    %1563 = vmatprep.subr.mxu0 0.0
    %1564 = vmatpush1.msra.mxu0 0.0
    %1565 = vmatprep.subr.mxu0 0.0
    %1566 = vmatpush1.msra.mxu0 0.0
    %1567 = vmatprep.subr.mxu0 0.0
    %1568 = vmatpush1.msra.mxu0 0.0
    %1569 = vmatprep.subr.mxu0 0.0
    %1570 = vmatpush1.msra.mxu0 0.0
    %1571 = vmatprep.subr.mxu0 0.0
    %1572 = vmatpush1.msra.mxu0 0.0
    %1573 = vmatprep.subr.mxu0 0.0
    %1574 = vmatpush1.msra.mxu0 0.0
    %1575 = vmatprep.subr.mxu0 0.0
    %1576 = vmatpush1.msra.mxu0 0.0
    %1577 = vmatprep.subr.mxu0 0.0
    %1578 = vmatpush1.msra.mxu0 0.0
    %1579 = vmatprep.subr.mxu0 0.0
    %1580 = vmatpush1.msra.mxu0 0.0
    %1581 = vmatprep.subr.mxu0 0.0
    %1582 = vmatpush1.msra.mxu0 0.0
    %1583 = vmatprep.mubr.f32.mxu0 0.0
    %1584 = vmatmul.mubr.f32.gmra.mrb[0].mxu0 %v1517
    %v1585 = vpop.f32.mrb[0].mxu0
    %v1586 = vadd.f32 0.0, %v1585
    %v1587 = vpop.f32.mrb[0].mxu0
    %1588 = vdwg.mxu0
    %v1590 = vsel %vm155, %v1503, 0
    %v1593 = vsel %vm155, %v1504, 0
    %1595 = vmatprep.subr.mxu0 0.0
    %1596 = vmatpush1.msra.mxu0 %v1586
    %1597 = vmatprep.subr.mxu0 0.0
    %1598 = vmatpush1.msra.mxu0 0.0
    %1599 = vmatprep.subr.mxu0 0.0
    %1600 = vmatpush1.msra.mxu0 0.0
    %1601 = vmatprep.subr.mxu0 0.0
    %1602 = vmatpush1.msra.mxu0 0.0
    %1603 = vmatprep.subr.mxu0 0.0
    %1604 = vmatpush1.msra.mxu0 0.0
    %1605 = vmatprep.subr.mxu0 0.0
    %1606 = vmatpush1.msra.mxu0 0.0
    %1607 = vmatprep.subr.mxu0 0.0
    %1608 = vmatpush1.msra.mxu0 0.0
    %1609 = vmatprep.subr.mxu0 0.0
    %1610 = vmatpush1.msra.mxu0 0.0
    %1611 = vmatprep.subr.mxu0 0.0
    %1612 = vmatpush1.msra.mxu0 0.0
    %1613 = vmatprep.subr.mxu0 0.0
    %1614 = vmatpush1.msra.mxu0 0.0
    %1615 = vmatprep.subr.mxu0 0.0
    %1616 = vmatpush1.msra.mxu0 0.0
    %1617 = vmatprep.subr.mxu0 0.0
    %1618 = vmatpush1.msra.mxu0 0.0
    %1619 = vmatprep.subr.mxu0 0.0
    %1620 = vmatpush1.msra.mxu0 0.0
    %1621 = vmatprep.subr.mxu0 0.0
    %1622 = vmatpush1.msra.mxu0 0.0
    %1623 = vmatprep.subr.mxu0 0.0
    %1624 = vmatpush1.msra.mxu0 0.0
    %1625 = vmatprep.subr.mxu0 0.0
    %1626 = vmatpush1.msra.mxu0 0.0
    %1627 = vmatprep.subr.mxu0 0.0
    %1628 = vmatpush1.msra.mxu0 0.0
    %1629 = vmatprep.subr.mxu0 0.0
    %1630 = vmatpush1.msra.mxu0 0.0
    %1631 = vmatprep.subr.mxu0 0.0
    %1632 = vmatpush1.msra.mxu0 0.0
    %1633 = vmatprep.subr.mxu0 0.0
    %1634 = vmatpush1.msra.mxu0 0.0
    %1635 = vmatprep.subr.mxu0 0.0
    %1636 = vmatpush1.msra.mxu0 0.0
    %1637 = vmatprep.subr.mxu0 0.0
    %1638 = vmatpush1.msra.mxu0 0.0
    %1639 = vmatprep.subr.mxu0 0.0
    %1640 = vmatpush1.msra.mxu0 0.0
    %1641 = vmatprep.subr.mxu0 0.0
    %1642 = vmatpush1.msra.mxu0 0.0
    %1643 = vmatprep.subr.mxu0 0.0
    %1644 = vmatpush1.msra.mxu0 0.0
    %1645 = vmatprep.subr.mxu0 0.0
    %1646 = vmatpush1.msra.mxu0 0.0
    %1647 = vmatprep.subr.mxu0 0.0
    %1648 = vmatpush1.msra.mxu0 0.0
    %1649 = vmatprep.subr.mxu0 0.0
    %1650 = vmatpush1.msra.mxu0 0.0
    %1651 = vmatprep.subr.mxu0 0.0
    %1652 = vmatpush1.msra.mxu0 0.0
    %1653 = vmatprep.subr.mxu0 0.0
    %1654 = vmatpush1.msra.mxu0 0.0
    %1655 = vmatprep.subr.mxu0 0.0
    %1656 = vmatpush1.msra.mxu0 0.0
    %1657 = vmatprep.subr.mxu0 0.0
    %1658 = vmatpush1.msra.mxu0 0.0
    %1659 = vmatprep.mubr.f32.mxu0 0.0
    %1660 = vmatmul.mubr.f32.gmra.mrb[0].mxu0 %v1590
    %v1661 = vpop.f32.mrb[0].mxu0
    %v1662 = vadd.f32 0.0, %v1661
    %v1663 = vpop.f32.mrb[0].mxu0
    %1664 = vmatprep.mubr.f32.mxu0 0.0
    %1665 = vmatmul.mubr.f32.gmra.mrb[0].mxu0 %v1593
    %v1666 = vpop.f32.mrb[0].mxu0
    %v1667 = vadd.f32 0.0, %v1666
    %v1668 = vpop.f32.mrb[0].mxu0
    %1669 = vdwg.mxu0
    %v1671 = vsel %vm310, %v1662, 0
    %v1674 = vsel %vm310, %v1667, 0
    %v1677 = vsel %vm317, %v1514, 0
    %v1680 = vsel %vm317, %v1515, 0
    %1682 = vmatprep.subr.mxu0 %v1507
    %1683 = vmatpush1.msra.mxu0 %v1506
    %1684 = vmatprep.subr.mxu0 %v1509
    %1685 = vmatpush1.msra.mxu0 %v1508
    %1686 = vmatprep.subr.mxu0 %v1511
    %1687 = vmatpush1.msra.mxu0 %v1510
    %1688 = vmatprep.subr.mxu0 %v1513
    %1689 = vmatpush1.msra.mxu0 %v1512
    %1690 = vmatprep.subr.mxu0 %v1680
    %1691 = vmatpush1.msra.mxu0 %v1677
    %1692 = vmatprep.subr.mxu0 0.0
    %1693 = vmatpush1.msra.mxu0 0.0
    %1694 = vmatprep.subr.mxu0 0.0
    %1695 = vmatpush1.msra.mxu0 0.0
    %1696 = vmatprep.subr.mxu0 0.0
    %1697 = vmatpush1.msra.mxu0 0.0
    %1698 = vmatprep.subr.mxu0 0.0
    %1699 = vmatpush1.msra.mxu0 0.0
    %1700 = vmatprep.subr.mxu0 0.0
    %1701 = vmatpush1.msra.mxu0 0.0
    %1702 = vmatprep.subr.mxu0 0.0
    %1703 = vmatpush1.msra.mxu0 0.0
    %1704 = vmatprep.subr.mxu0 0.0
    %1705 = vmatpush1.msra.mxu0 0.0
    %1706 = vmatprep.subr.mxu0 0.0
    %1707 = vmatpush1.msra.mxu0 0.0
    %1708 = vmatprep.subr.mxu0 0.0
    %1709 = vmatpush1.msra.mxu0 0.0
    %1710 = vmatprep.subr.mxu0 0.0
    %1711 = vmatpush1.msra.mxu0 0.0
    %1712 = vmatprep.subr.mxu0 0.0
    %1713 = vmatpush1.msra.mxu0 0.0
    %1714 = vmatprep.subr.mxu0 0.0
    %1715 = vmatpush1.msra.mxu0 0.0
    %1716 = vmatprep.subr.mxu0 0.0
    %1717 = vmatpush1.msra.mxu0 0.0
    %1718 = vmatprep.subr.mxu0 0.0
    %1719 = vmatpush1.msra.mxu0 0.0
    %1720 = vmatprep.subr.mxu0 0.0
    %1721 = vmatpush1.msra.mxu0 0.0
    %1722 = vmatprep.subr.mxu0 0.0
    %1723 = vmatpush1.msra.mxu0 0.0
    %1724 = vmatprep.subr.mxu0 0.0
    %1725 = vmatpush1.msra.mxu0 0.0
    %1726 = vmatprep.subr.mxu0 0.0
    %1727 = vmatpush1.msra.mxu0 0.0
    %1728 = vmatprep.subr.mxu0 0.0
    %1729 = vmatpush1.msra.mxu0 0.0
    %1730 = vmatprep.subr.mxu0 0.0
    %1731 = vmatpush1.msra.mxu0 0.0
    %1732 = vmatprep.subr.mxu0 0.0
    %1733 = vmatpush1.msra.mxu0 0.0
    %1734 = vmatprep.subr.mxu0 0.0
    %1735 = vmatpush1.msra.mxu0 0.0
    %1736 = vmatprep.subr.mxu0 0.0
    %1737 = vmatpush1.msra.mxu0 0.0
    %1738 = vmatprep.subr.mxu0 0.0
    %1739 = vmatpush1.msra.mxu0 0.0
    %1740 = vmatprep.subr.mxu0 0.0
    %1741 = vmatpush1.msra.mxu0 0.0
    %1742 = vmatprep.subr.mxu0 0.0
    %1743 = vmatpush1.msra.mxu0 0.0
    %1744 = vmatprep.subr.mxu0 0.0
    %1745 = vmatpush1.msra.mxu0 0.0
    %1746 = vmatprep.mubr.f32.mxu0 0.0
    %1747 = vmatmul.mubr.f32.gmra.mrb[0].mxu0 %v1671
    %v1748 = vpop.f32.mrb[0].mxu0
    %v1749 = vadd.f32 0.0, %v1748
    %v1750 = vpop.f32.mrb[0].mxu0
    %v1751 = vadd.f32 0.0, %v1750
    %1752 = vmatprep.mubr.f32.mxu0 0.0
    %1753 = vmatmul.mubr.f32.gmra.mrb[0].mxu0 %v1674
    %v1754 = vpop.f32.mrb[0].mxu0
    %v1755 = vadd.f32 0.0, %v1754
    %v1756 = vpop.f32.mrb[0].mxu0
    %v1757 = vadd.f32 0.0, %v1756
    %1758 = vdwg.mxu0
    %v1759 = vadd.f32 %v1156, %v1749
    %v1760 = vadd.f32 %v1157, %v1751
    %v1761 = vadd.f32 %v1158, %v1755
    %v1762 = vadd.f32 %v1159, %v1757
    %1763 = vmatprep.subr.mxu0 0.0
    %1764 = vmatpush1.msra.mxu0 %v1497
    %1765 = vmatprep.subr.mxu0 0.0
    %1766 = vmatpush1.msra.mxu0 0.0
    %1767 = vmatprep.subr.mxu0 0.0
    %1768 = vmatpush1.msra.mxu0 0.0
    %1769 = vmatprep.subr.mxu0 0.0
    %1770 = vmatpush1.msra.mxu0 0.0
    %1771 = vmatprep.subr.mxu0 0.0
    %1772 = vmatpush1.msra.mxu0 0.0
    %1773 = vmatprep.subr.mxu0 0.0
    %1774 = vmatpush1.msra.mxu0 0.0
    %1775 = vmatprep.subr.mxu0 0.0
    %1776 = vmatpush1.msra.mxu0 0.0
    %1777 = vmatprep.subr.mxu0 0.0
    %1778 = vmatpush1.msra.mxu0 0.0
    %1779 = vmatprep.subr.mxu0 0.0
    %1780 = vmatpush1.msra.mxu0 0.0
    %1781 = vmatprep.subr.mxu0 0.0
    %1782 = vmatpush1.msra.mxu0 0.0
    %1783 = vmatprep.subr.mxu0 0.0
    %1784 = vmatpush1.msra.mxu0 0.0
    %1785 = vmatprep.subr.mxu0 0.0
    %1786 = vmatpush1.msra.mxu0 0.0
    %1787 = vmatprep.subr.mxu0 0.0
    %1788 = vmatpush1.msra.mxu0 0.0
    %1789 = vmatprep.subr.mxu0 0.0
    %1790 = vmatpush1.msra.mxu0 0.0
    %1791 = vmatprep.subr.mxu0 0.0
    %1792 = vmatpush1.msra.mxu0 0.0
    %1793 = vmatprep.subr.mxu0 0.0
    %1794 = vmatpush1.msra.mxu0 0.0
    %1795 = vmatprep.subr.mxu0 0.0
    %1796 = vmatpush1.msra.mxu0 0.0
    %1797 = vmatprep.subr.mxu0 0.0
    %1798 = vmatpush1.msra.mxu0 0.0
    %1799 = vmatprep.subr.mxu0 0.0
    %1800 = vmatpush1.msra.mxu0 0.0
    %1801 = vmatprep.subr.mxu0 0.0
    %1802 = vmatpush1.msra.mxu0 0.0
    %1803 = vmatprep.subr.mxu0 0.0
    %1804 = vmatpush1.msra.mxu0 0.0
    %1805 = vmatprep.subr.mxu0 0.0
    %1806 = vmatpush1.msra.mxu0 0.0
    %1807 = vmatprep.subr.mxu0 0.0
    %1808 = vmatpush1.msra.mxu0 0.0
    %1809 = vmatprep.subr.mxu0 0.0
    %1810 = vmatpush1.msra.mxu0 0.0
    %1811 = vmatprep.subr.mxu0 0.0
    %1812 = vmatpush1.msra.mxu0 0.0
    %1813 = vmatprep.subr.mxu0 0.0
    %1814 = vmatpush1.msra.mxu0 0.0
    %1815 = vmatprep.subr.mxu0 0.0
    %1816 = vmatpush1.msra.mxu0 0.0
    %1817 = vmatprep.subr.mxu0 0.0
    %1818 = vmatpush1.msra.mxu0 0.0
    %1819 = vmatprep.subr.mxu0 0.0
    %1820 = vmatpush1.msra.mxu0 0.0
    %1821 = vmatprep.subr.mxu0 0.0
    %1822 = vmatpush1.msra.mxu0 0.0
    %1823 = vmatprep.subr.mxu0 0.0
    %1824 = vmatpush1.msra.mxu0 0.0
    %1825 = vmatprep.subr.mxu0 0.0
    %1826 = vmatpush1.msra.mxu0 0.0
    %1827 = vmatprep.mubr.f32.mxu0 0.0
    %1828 = vmatmul.mubr.f32.gmra.mrb[0].mxu0 %v1517
    %v1829 = vpop.f32.mrb[0].mxu0
    %v1830 = vadd.f32 0.0, %v1829
    %v1831 = vpop.f32.mrb[0].mxu0
    %1832 = vdwg.mxu0
    %1833 = vmatprep.subr.mxu0 0.0
    %1834 = vmatpush1.msra.mxu0 %v1830
    %1835 = vmatprep.subr.mxu0 0.0
    %1836 = vmatpush1.msra.mxu0 0.0
    %1837 = vmatprep.subr.mxu0 0.0
    %1838 = vmatpush1.msra.mxu0 0.0
    %1839 = vmatprep.subr.mxu0 0.0
    %1840 = vmatpush1.msra.mxu0 0.0
    %1841 = vmatprep.subr.mxu0 0.0
    %1842 = vmatpush1.msra.mxu0 0.0
    %1843 = vmatprep.subr.mxu0 0.0
    %1844 = vmatpush1.msra.mxu0 0.0
    %1845 = vmatprep.subr.mxu0 0.0
    %1846 = vmatpush1.msra.mxu0 0.0
    %1847 = vmatprep.subr.mxu0 0.0
    %1848 = vmatpush1.msra.mxu0 0.0
    %1849 = vmatprep.subr.mxu0 0.0
    %1850 = vmatpush1.msra.mxu0 0.0
    %1851 = vmatprep.subr.mxu0 0.0
    %1852 = vmatpush1.msra.mxu0 0.0
    %1853 = vmatprep.subr.mxu0 0.0
    %1854 = vmatpush1.msra.mxu0 0.0
    %1855 = vmatprep.subr.mxu0 0.0
    %1856 = vmatpush1.msra.mxu0 0.0
    %1857 = vmatprep.subr.mxu0 0.0
    %1858 = vmatpush1.msra.mxu0 0.0
    %1859 = vmatprep.subr.mxu0 0.0
    %1860 = vmatpush1.msra.mxu0 0.0
    %1861 = vmatprep.subr.mxu0 0.0
    %1862 = vmatpush1.msra.mxu0 0.0
    %1863 = vmatprep.subr.mxu0 0.0
    %1864 = vmatpush1.msra.mxu0 0.0
    %1865 = vmatprep.subr.mxu0 0.0
    %1866 = vmatpush1.msra.mxu0 0.0
    %1867 = vmatprep.subr.mxu0 0.0
    %1868 = vmatpush1.msra.mxu0 0.0
    %1869 = vmatprep.subr.mxu0 0.0
    %1870 = vmatpush1.msra.mxu0 0.0
    %1871 = vmatprep.subr.mxu0 0.0
    %1872 = vmatpush1.msra.mxu0 0.0
    %1873 = vmatprep.subr.mxu0 0.0
    %1874 = vmatpush1.msra.mxu0 0.0
    %1875 = vmatprep.subr.mxu0 0.0
    %1876 = vmatpush1.msra.mxu0 0.0
    %1877 = vmatprep.subr.mxu0 0.0
    %1878 = vmatpush1.msra.mxu0 0.0
    %1879 = vmatprep.subr.mxu0 0.0
    %1880 = vmatpush1.msra.mxu0 0.0
    %1881 = vmatprep.subr.mxu0 0.0
    %1882 = vmatpush1.msra.mxu0 0.0
    %1883 = vmatprep.subr.mxu0 0.0
    %1884 = vmatpush1.msra.mxu0 0.0
    %1885 = vmatprep.subr.mxu0 0.0
    %1886 = vmatpush1.msra.mxu0 0.0
    %1887 = vmatprep.subr.mxu0 0.0
    %1888 = vmatpush1.msra.mxu0 0.0
    %1889 = vmatprep.subr.mxu0 0.0
    %1890 = vmatpush1.msra.mxu0 0.0
    %1891 = vmatprep.subr.mxu0 0.0
    %1892 = vmatpush1.msra.mxu0 0.0
    %1893 = vmatprep.subr.mxu0 0.0
    %1894 = vmatpush1.msra.mxu0 0.0
    %1895 = vmatprep.subr.mxu0 0.0
    %1896 = vmatpush1.msra.mxu0 0.0
    %1897 = vmatprep.mubr.f32.mxu0 0.0
    %1898 = vmatmul.mubr.f32.gmra.mrb[0].mxu0 %v1590
    %v1899 = vpop.f32.mrb[0].mxu0
    %v1900 = vadd.f32 0.0, %v1899
    %v1901 = vpop.f32.mrb[0].mxu0
    %1902 = vmatprep.mubr.f32.mxu0 0.0
    %1903 = vmatmul.mubr.f32.gmra.mrb[0].mxu0 %v1593
    %v1904 = vpop.f32.mrb[0].mxu0
    %v1905 = vadd.f32 0.0, %v1904
    %v1906 = vpop.f32.mrb[0].mxu0
    %1907 = vdwg.mxu0
    %v1909 = vsel %vm310, %v1900, 0
    %v1912 = vsel %vm310, %v1905, 0
    %1914 = vmatprep.subr.mxu0 %v1507
    %1915 = vmatpush1.msra.mxu0 %v1506
    %1916 = vmatprep.subr.mxu0 %v1509
    %1917 = vmatpush1.msra.mxu0 %v1508
    %1918 = vmatprep.subr.mxu0 %v1511
    %1919 = vmatpush1.msra.mxu0 %v1510
    %1920 = vmatprep.subr.mxu0 %v1513
    %1921 = vmatpush1.msra.mxu0 %v1512
    %1922 = vmatprep.subr.mxu0 %v1680
    %1923 = vmatpush1.msra.mxu0 %v1677
    %1924 = vmatprep.subr.mxu0 0.0
    %1925 = vmatpush1.msra.mxu0 0.0
    %1926 = vmatprep.subr.mxu0 0.0
    %1927 = vmatpush1.msra.mxu0 0.0
    %1928 = vmatprep.subr.mxu0 0.0
    %1929 = vmatpush1.msra.mxu0 0.0
    %1930 = vmatprep.subr.mxu0 0.0
    %1931 = vmatpush1.msra.mxu0 0.0
    %1932 = vmatprep.subr.mxu0 0.0
    %1933 = vmatpush1.msra.mxu0 0.0
    %1934 = vmatprep.subr.mxu0 0.0
    %1935 = vmatpush1.msra.mxu0 0.0
    %1936 = vmatprep.subr.mxu0 0.0
    %1937 = vmatpush1.msra.mxu0 0.0
    %1938 = vmatprep.subr.mxu0 0.0
    %1939 = vmatpush1.msra.mxu0 0.0
    %1940 = vmatprep.subr.mxu0 0.0
    %1941 = vmatpush1.msra.mxu0 0.0
    %1942 = vmatprep.subr.mxu0 0.0
    %1943 = vmatpush1.msra.mxu0 0.0
    %1944 = vmatprep.subr.mxu0 0.0
    %1945 = vmatpush1.msra.mxu0 0.0
    %1946 = vmatprep.subr.mxu0 0.0
    %1947 = vmatpush1.msra.mxu0 0.0
    %1948 = vmatprep.subr.mxu0 0.0
    %1949 = vmatpush1.msra.mxu0 0.0
    %1950 = vmatprep.subr.mxu0 0.0
    %1951 = vmatpush1.msra.mxu0 0.0
    %1952 = vmatprep.subr.mxu0 0.0
    %1953 = vmatpush1.msra.mxu0 0.0
    %1954 = vmatprep.subr.mxu0 0.0
    %1955 = vmatpush1.msra.mxu0 0.0
    %1956 = vmatprep.subr.mxu0 0.0
    %1957 = vmatpush1.msra.mxu0 0.0
    %1958 = vmatprep.subr.mxu0 0.0
    %1959 = vmatpush1.msra.mxu0 0.0
    %1960 = vmatprep.subr.mxu0 0.0
    %1961 = vmatpush1.msra.mxu0 0.0
    %1962 = vmatprep.subr.mxu0 0.0
    %1963 = vmatpush1.msra.mxu0 0.0
    %1964 = vmatprep.subr.mxu0 0.0
    %1965 = vmatpush1.msra.mxu0 0.0
    %1966 = vmatprep.subr.mxu0 0.0
    %1967 = vmatpush1.msra.mxu0 0.0
    %1968 = vmatprep.subr.mxu0 0.0
    %1969 = vmatpush1.msra.mxu0 0.0
    %1970 = vmatprep.subr.mxu0 0.0
    %1971 = vmatpush1.msra.mxu0 0.0
    %1972 = vmatprep.subr.mxu0 0.0
    %1973 = vmatpush1.msra.mxu0 0.0
    %1974 = vmatprep.subr.mxu0 0.0
    %1975 = vmatpush1.msra.mxu0 0.0
    %1976 = vmatprep.subr.mxu0 0.0
    %1977 = vmatpush1.msra.mxu0 0.0
    %1978 = vmatprep.mubr.f32.mxu0 0.0
    %1979 = vmatmul.mubr.f32.gmra.mrb[0].mxu0 %v1909
    %v1980 = vpop.f32.mrb[0].mxu0
    %v1981 = vadd.f32 0.0, %v1980
    %v1982 = vpop.f32.mrb[0].mxu0
    %v1983 = vadd.f32 0.0, %v1982
    %1984 = vmatprep.mubr.f32.mxu0 0.0
    %1985 = vmatmul.mubr.f32.gmra.mrb[0].mxu0 %v1912
    %v1986 = vpop.f32.mrb[0].mxu0
    %v1987 = vadd.f32 0.0, %v1986
    %v1988 = vpop.f32.mrb[0].mxu0
    %v1989 = vadd.f32 0.0, %v1988
    %1990 = vdwg.mxu0
    %v1991 = vadd.f32 %v1388, %v1981
    %v1992 = vadd.f32 %v1389, %v1983
    %v1993 = vadd.f32 %v1390, %v1987
    %v1994 = vadd.f32 %v1391, %v1989
    %s1995 = scalar_lea.vmem %s1, 768
    %v1996 = vld [vmem:[%s1995] sm:$0xff]
    %v1997 = vld [vmem:[%s1995 + $0x8] sm:$0xff]
    %v1998 = vld [vmem:[%s1995 + $0x10] sm:$0xff]
    %v1999 = vld [vmem:[%s1995 + $0x18] sm:$0xff]
    %v2000 = vld [vmem:[%s1995 + $0x20] sm:$0xff]
    %v2001 = vld [vmem:[%s1995 + $0x28] sm:$0xff]
    %v2002 = vld [vmem:[%s1995 + $0x30] sm:$0xff]
    %v2003 = vld [vmem:[%s1995 + $0x38] sm:$0xff]
    %v2004 = vld [vmem:[%s1995 + $0x40] sm:$0xff]
    %v2005 = vld [vmem:[%s1995 + $0x48] sm:$0xff]
    %v2006 = vld [vmem:[%s1995 + $0x50] sm:$0xff]
    %v2007 = vld [vmem:[%s1995 + $0x58] sm:$0xff]
    %v2008 = vld [vmem:[%s1995 + $0x60] sm:$0xff]
    %v2009 = vld [vmem:[%s1995 + $0x68] sm:$0xff]
    %v2010 = vld [vmem:[%s1995 + $0x70] sm:$0xff]
    %v2011 = vld [vmem:[%s1995 + $0x78] sm:$0xff]
    %v2012 = vld [vmem:[%s1995 + $0x80] sm:$0xff]
    %v2013 = vld [vmem:[%s1995 + $0x88] sm:$0xff]
    %v2014 = vld [vmem:[%s1995 + $0x90] sm:$0xff]
    %v2015 = vld [vmem:[%s1995 + $0x98] sm:$0xff]
    %v2016 = vld [vmem:[%s1995 + $0xa0] sm:$0xff]
    %v2017 = vld [vmem:[%s1995 + $0xa8] sm:$0xff]
    %v2018 = vld [vmem:[%s1995 + $0xb0] sm:$0xff]
    %v2019 = vld [vmem:[%s1995 + $0xb8] sm:$0xff]
    %v2020 = vld [vmem:[%s1995 + $0xc0] sm:$0xff]
    %v2021 = vld [vmem:[%s1995 + $0xc8] sm:$0xff]
    %v2022 = vld [vmem:[%s1995 + $0xd0] sm:$0xff]
    %v2023 = vld [vmem:[%s1995 + $0xd8] sm:$0xff]
    %v2024 = vld [vmem:[%s1995 + $0xe0] sm:$0xff]
    %v2025 = vld [vmem:[%s1995 + $0xe8] sm:$0xff]
    %v2026 = vld [vmem:[%s1995 + $0xf0] sm:$0xff]
    %v2027 = vld [vmem:[%s1995 + $0xf8] sm:$0xff]
    %2028 = vmatprep.subr.mxu0 0.0
    %2029 = vmatpush1.msra.mxu0 %v1996
    %2030 = vmatprep.subr.mxu0 0.0
    %2031 = vmatpush1.msra.mxu0 %v1997
    %2032 = vmatprep.subr.mxu0 0.0
    %2033 = vmatpush1.msra.mxu0 %v1998
    %2034 = vmatprep.subr.mxu0 0.0
    %2035 = vmatpush1.msra.mxu0 %v1999
    %2036 = vmatprep.subr.mxu0 0.0
    %2037 = vmatpush1.msra.mxu0 %v2000
    %2038 = vmatprep.subr.mxu0 0.0
    %2039 = vmatpush1.msra.mxu0 %v2001
    %2040 = vmatprep.subr.mxu0 0.0
    %2041 = vmatpush1.msra.mxu0 %v2002
    %2042 = vmatprep.subr.mxu0 0.0
    %2043 = vmatpush1.msra.mxu0 %v2003
    %2044 = vmatprep.subr.mxu0 0.0
    %2045 = vmatpush1.msra.mxu0 %v2004
    %2046 = vmatprep.subr.mxu0 0.0
    %2047 = vmatpush1.msra.mxu0 %v2005
    %2048 = vmatprep.subr.mxu0 0.0
    %2049 = vmatpush1.msra.mxu0 %v2006
    %2050 = vmatprep.subr.mxu0 0.0
    %2051 = vmatpush1.msra.mxu0 %v2007
    %2052 = vmatprep.subr.mxu0 0.0
    %2053 = vmatpush1.msra.mxu0 %v2008
    %2054 = vmatprep.subr.mxu0 0.0
    %2055 = vmatpush1.msra.mxu0 %v2009
    %2056 = vmatprep.subr.mxu0 0.0
    %2057 = vmatpush1.msra.mxu0 %v2010
    %2058 = vmatprep.subr.mxu0 0.0
    %2059 = vmatpush1.msra.mxu0 %v2011
    %2060 = vmatprep.subr.mxu0 0.0
    %2061 = vmatpush1.msra.mxu0 %v2012
    %2062 = vmatprep.subr.mxu0 0.0
    %2063 = vmatpush1.msra.mxu0 %v2013
    %2064 = vmatprep.subr.mxu0 0.0
    %2065 = vmatpush1.msra.mxu0 %v2014
    %2066 = vmatprep.subr.mxu0 0.0
    %2067 = vmatpush1.msra.mxu0 %v2015
    %2068 = vmatprep.subr.mxu0 0.0
    %2069 = vmatpush1.msra.mxu0 %v2016
    %2070 = vmatprep.subr.mxu0 0.0
    %2071 = vmatpush1.msra.mxu0 %v2017
    %2072 = vmatprep.subr.mxu0 0.0
    %2073 = vmatpush1.msra.mxu0 %v2018
    %2074 = vmatprep.subr.mxu0 0.0
    %2075 = vmatpush1.msra.mxu0 %v2019
    %2076 = vmatprep.subr.mxu0 0.0
    %2077 = vmatpush1.msra.mxu0 %v2020
    %2078 = vmatprep.subr.mxu0 0.0
    %2079 = vmatpush1.msra.mxu0 %v2021
    %2080 = vmatprep.subr.mxu0 0.0
    %2081 = vmatpush1.msra.mxu0 %v2022
    %2082 = vmatprep.subr.mxu0 0.0
    %2083 = vmatpush1.msra.mxu0 %v2023
    %2084 = vmatprep.subr.mxu0 0.0
    %2085 = vmatpush1.msra.mxu0 %v2024
    %2086 = vmatprep.subr.mxu0 0.0
    %2087 = vmatpush1.msra.mxu0 %v2025
    %2088 = vmatprep.subr.mxu0 0.0
    %2089 = vmatpush1.msra.mxu0 %v2026
    %2090 = vmatprep.subr.mxu0 0.0
    %2091 = vmatpush1.msra.mxu0 %v2027
    %2092 = vmatprep.mubr.f32.mxu0 %v28
    %2093 = vmatmul.mubr.f32.gmra.mrb[0].mxu0 %v27
    %v2094 = vpop.f32.mrb[0].mxu0
    %v2095 = vadd.f32 0.0, %v2094
    %v2096 = vpop.f32.mrb[0].mxu0
    %2097 = vmatprep.mubr.f32.mxu0 %v30
    %2098 = vmatmul.mubr.f32.gmra.mrb[0].mxu0 %v29
    %v2099 = vpop.f32.mrb[0].mxu0
    %v2100 = vadd.f32 0.0, %v2099
    %v2101 = vpop.f32.mrb[0].mxu0
    %2102 = vdwg.mxu0
    %s2103 = scalar_lea.vmem %s3, 24
    %v2104 = vld [vmem:[%s2103] sm:$0xff]
    %s2105 = scalar_lea.vmem %s4, 48
    %v2106 = vld [vmem:[%s2105] sm:$0xff]
    %v2107 = vld [vmem:[%s2105 + $0x8] sm:$0xff]
    %s2108 = scalar_lea.vmem %s2, 240
    %v2109 = vld [vmem:[%s2108] sm:$0xff]
    %v2110 = vld [vmem:[%s2108 + $0x8] sm:$0xff]
    %v2111 = vld [vmem:[%s2108 + $0x10] sm:$0xff]
    %v2112 = vld [vmem:[%s2108 + $0x18] sm:$0xff]
    %v2113 = vld [vmem:[%s2108 + $0x20] sm:$0xff]
    %v2114 = vld [vmem:[%s2108 + $0x28] sm:$0xff]
    %v2115 = vld [vmem:[%s2108 + $0x30] sm:$0xff]
    %v2116 = vld [vmem:[%s2108 + $0x38] sm:$0xff]
    %v2117 = vld [vmem:[%s2108 + $0x40] sm:$0xf]
    %v2118 = vld [vmem:[%s2108 + $0x48] sm:$0xf]
    %v2120 = vsel %vm155, %v2104, 0
    %2122 = vmatprep.subr.mxu0 0.0
    %2123 = vmatpush1.msra.mxu0 %v2095
    %2124 = vmatprep.subr.mxu0 0.0
    %2125 = vmatpush1.msra.mxu0 0.0
    %2126 = vmatprep.subr.mxu0 0.0
    %2127 = vmatpush1.msra.mxu0 0.0
    %2128 = vmatprep.subr.mxu0 0.0
    %2129 = vmatpush1.msra.mxu0 0.0
    %2130 = vmatprep.subr.mxu0 0.0
    %2131 = vmatpush1.msra.mxu0 0.0
    %2132 = vmatprep.subr.mxu0 0.0
    %2133 = vmatpush1.msra.mxu0 0.0
    %2134 = vmatprep.subr.mxu0 0.0
    %2135 = vmatpush1.msra.mxu0 0.0
    %2136 = vmatprep.subr.mxu0 0.0
    %2137 = vmatpush1.msra.mxu0 0.0
    %2138 = vmatprep.subr.mxu0 0.0
    %2139 = vmatpush1.msra.mxu0 0.0
    %2140 = vmatprep.subr.mxu0 0.0
    %2141 = vmatpush1.msra.mxu0 0.0
    %2142 = vmatprep.subr.mxu0 0.0
    %2143 = vmatpush1.msra.mxu0 0.0
    %2144 = vmatprep.subr.mxu0 0.0
    %2145 = vmatpush1.msra.mxu0 0.0
    %2146 = vmatprep.subr.mxu0 0.0
    %2147 = vmatpush1.msra.mxu0 0.0
    %2148 = vmatprep.subr.mxu0 0.0
    %2149 = vmatpush1.msra.mxu0 0.0
    %2150 = vmatprep.subr.mxu0 0.0
    %2151 = vmatpush1.msra.mxu0 0.0
    %2152 = vmatprep.subr.mxu0 0.0
    %2153 = vmatpush1.msra.mxu0 0.0
    %2154 = vmatprep.subr.mxu0 0.0
    %2155 = vmatpush1.msra.mxu0 0.0
    %2156 = vmatprep.subr.mxu0 0.0
    %2157 = vmatpush1.msra.mxu0 0.0
    %2158 = vmatprep.subr.mxu0 0.0
    %2159 = vmatpush1.msra.mxu0 0.0
    %2160 = vmatprep.subr.mxu0 0.0
    %2161 = vmatpush1.msra.mxu0 0.0
    %2162 = vmatprep.subr.mxu0 0.0
    %2163 = vmatpush1.msra.mxu0 0.0
    %2164 = vmatprep.subr.mxu0 0.0
    %2165 = vmatpush1.msra.mxu0 0.0
    %2166 = vmatprep.subr.mxu0 0.0
    %2167 = vmatpush1.msra.mxu0 0.0
    %2168 = vmatprep.subr.mxu0 0.0
    %2169 = vmatpush1.msra.mxu0 0.0
    %2170 = vmatprep.subr.mxu0 0.0
    %2171 = vmatpush1.msra.mxu0 0.0
    %2172 = vmatprep.subr.mxu0 0.0
    %2173 = vmatpush1.msra.mxu0 0.0
    %2174 = vmatprep.subr.mxu0 0.0
    %2175 = vmatpush1.msra.mxu0 0.0
    %2176 = vmatprep.subr.mxu0 0.0
    %2177 = vmatpush1.msra.mxu0 0.0
    %2178 = vmatprep.subr.mxu0 0.0
    %2179 = vmatpush1.msra.mxu0 0.0
    %2180 = vmatprep.subr.mxu0 0.0
    %2181 = vmatpush1.msra.mxu0 0.0
    %2182 = vmatprep.subr.mxu0 0.0
    %2183 = vmatpush1.msra.mxu0 0.0
    %2184 = vmatprep.subr.mxu0 0.0
    %2185 = vmatpush1.msra.mxu0 0.0
    %2186 = vmatprep.mubr.f32.mxu0 0.0
    %2187 = vmatmul.mubr.f32.gmra.mrb[0].mxu0 %v2120
    %v2188 = vpop.f32.mrb[0].mxu0
    %v2189 = vadd.f32 0.0, %v2188
    %v2190 = vpop.f32.mrb[0].mxu0
    %2191 = vdwg.mxu0
    %v2193 = vsel %vm155, %v2106, 0
    %v2196 = vsel %vm155, %v2107, 0
    %2198 = vmatprep.subr.mxu0 0.0
    %2199 = vmatpush1.msra.mxu0 %v2189
    %2200 = vmatprep.subr.mxu0 0.0
    %2201 = vmatpush1.msra.mxu0 0.0
    %2202 = vmatprep.subr.mxu0 0.0
    %2203 = vmatpush1.msra.mxu0 0.0
    %2204 = vmatprep.subr.mxu0 0.0
    %2205 = vmatpush1.msra.mxu0 0.0
    %2206 = vmatprep.subr.mxu0 0.0
    %2207 = vmatpush1.msra.mxu0 0.0
    %2208 = vmatprep.subr.mxu0 0.0
    %2209 = vmatpush1.msra.mxu0 0.0
    %2210 = vmatprep.subr.mxu0 0.0
    %2211 = vmatpush1.msra.mxu0 0.0
    %2212 = vmatprep.subr.mxu0 0.0
    %2213 = vmatpush1.msra.mxu0 0.0
    %2214 = vmatprep.subr.mxu0 0.0
    %2215 = vmatpush1.msra.mxu0 0.0
    %2216 = vmatprep.subr.mxu0 0.0
    %2217 = vmatpush1.msra.mxu0 0.0
    %2218 = vmatprep.subr.mxu0 0.0
    %2219 = vmatpush1.msra.mxu0 0.0
    %2220 = vmatprep.subr.mxu0 0.0
    %2221 = vmatpush1.msra.mxu0 0.0
    %2222 = vmatprep.subr.mxu0 0.0
    %2223 = vmatpush1.msra.mxu0 0.0
    %2224 = vmatprep.subr.mxu0 0.0
    %2225 = vmatpush1.msra.mxu0 0.0
    %2226 = vmatprep.subr.mxu0 0.0
    %2227 = vmatpush1.msra.mxu0 0.0
    %2228 = vmatprep.subr.mxu0 0.0
    %2229 = vmatpush1.msra.mxu0 0.0
    %2230 = vmatprep.subr.mxu0 0.0
    %2231 = vmatpush1.msra.mxu0 0.0
    %2232 = vmatprep.subr.mxu0 0.0
    %2233 = vmatpush1.msra.mxu0 0.0
    %2234 = vmatprep.subr.mxu0 0.0
    %2235 = vmatpush1.msra.mxu0 0.0
    %2236 = vmatprep.subr.mxu0 0.0
    %2237 = vmatpush1.msra.mxu0 0.0
    %2238 = vmatprep.subr.mxu0 0.0
    %2239 = vmatpush1.msra.mxu0 0.0
    %2240 = vmatprep.subr.mxu0 0.0
    %2241 = vmatpush1.msra.mxu0 0.0
    %2242 = vmatprep.subr.mxu0 0.0
    %2243 = vmatpush1.msra.mxu0 0.0
    %2244 = vmatprep.subr.mxu0 0.0
    %2245 = vmatpush1.msra.mxu0 0.0
    %2246 = vmatprep.subr.mxu0 0.0
    %2247 = vmatpush1.msra.mxu0 0.0
    %2248 = vmatprep.subr.mxu0 0.0
    %2249 = vmatpush1.msra.mxu0 0.0
    %2250 = vmatprep.subr.mxu0 0.0
    %2251 = vmatpush1.msra.mxu0 0.0
    %2252 = vmatprep.subr.mxu0 0.0
    %2253 = vmatpush1.msra.mxu0 0.0
    %2254 = vmatprep.subr.mxu0 0.0
    %2255 = vmatpush1.msra.mxu0 0.0
    %2256 = vmatprep.subr.mxu0 0.0
    %2257 = vmatpush1.msra.mxu0 0.0
    %2258 = vmatprep.subr.mxu0 0.0
    %2259 = vmatpush1.msra.mxu0 0.0
    %2260 = vmatprep.subr.mxu0 0.0
    %2261 = vmatpush1.msra.mxu0 0.0
    %2262 = vmatprep.mubr.f32.mxu0 0.0
    %2263 = vmatmul.mubr.f32.gmra.mrb[0].mxu0 %v2193
    %v2264 = vpop.f32.mrb[0].mxu0
    %v2265 = vadd.f32 0.0, %v2264
    %v2266 = vpop.f32.mrb[0].mxu0
    %2267 = vmatprep.mubr.f32.mxu0 0.0
    %2268 = vmatmul.mubr.f32.gmra.mrb[0].mxu0 %v2196
    %v2269 = vpop.f32.mrb[0].mxu0
    %v2270 = vadd.f32 0.0, %v2269
    %v2271 = vpop.f32.mrb[0].mxu0
    %2272 = vdwg.mxu0
    %v2274 = vsel %vm310, %v2265, 0
    %v2277 = vsel %vm310, %v2270, 0
    %v2280 = vsel %vm317, %v2117, 0
    %v2283 = vsel %vm317, %v2118, 0
    %2285 = vmatprep.subr.mxu0 %v2110
    %2286 = vmatpush1.msra.mxu0 %v2109
    %2287 = vmatprep.subr.mxu0 %v2112
    %2288 = vmatpush1.msra.mxu0 %v2111
    %2289 = vmatprep.subr.mxu0 %v2114
    %2290 = vmatpush1.msra.mxu0 %v2113
    %2291 = vmatprep.subr.mxu0 %v2116
    %2292 = vmatpush1.msra.mxu0 %v2115
    %2293 = vmatprep.subr.mxu0 %v2283
    %2294 = vmatpush1.msra.mxu0 %v2280
    %2295 = vmatprep.subr.mxu0 0.0
    %2296 = vmatpush1.msra.mxu0 0.0
    %2297 = vmatprep.subr.mxu0 0.0
    %2298 = vmatpush1.msra.mxu0 0.0
    %2299 = vmatprep.subr.mxu0 0.0
    %2300 = vmatpush1.msra.mxu0 0.0
    %2301 = vmatprep.subr.mxu0 0.0
    %2302 = vmatpush1.msra.mxu0 0.0
    %2303 = vmatprep.subr.mxu0 0.0
    %2304 = vmatpush1.msra.mxu0 0.0
    %2305 = vmatprep.subr.mxu0 0.0
    %2306 = vmatpush1.msra.mxu0 0.0
    %2307 = vmatprep.subr.mxu0 0.0
    %2308 = vmatpush1.msra.mxu0 0.0
    %2309 = vmatprep.subr.mxu0 0.0
    %2310 = vmatpush1.msra.mxu0 0.0
    %2311 = vmatprep.subr.mxu0 0.0
    %2312 = vmatpush1.msra.mxu0 0.0
    %2313 = vmatprep.subr.mxu0 0.0
    %2314 = vmatpush1.msra.mxu0 0.0
    %2315 = vmatprep.subr.mxu0 0.0
    %2316 = vmatpush1.msra.mxu0 0.0
    %2317 = vmatprep.subr.mxu0 0.0
    %2318 = vmatpush1.msra.mxu0 0.0
    %2319 = vmatprep.subr.mxu0 0.0
    %2320 = vmatpush1.msra.mxu0 0.0
    %2321 = vmatprep.subr.mxu0 0.0
    %2322 = vmatpush1.msra.mxu0 0.0
    %2323 = vmatprep.subr.mxu0 0.0
    %2324 = vmatpush1.msra.mxu0 0.0
    %2325 = vmatprep.subr.mxu0 0.0
    %2326 = vmatpush1.msra.mxu0 0.0
    %2327 = vmatprep.subr.mxu0 0.0
    %2328 = vmatpush1.msra.mxu0 0.0
    %2329 = vmatprep.subr.mxu0 0.0
    %2330 = vmatpush1.msra.mxu0 0.0
    %2331 = vmatprep.subr.mxu0 0.0
    %2332 = vmatpush1.msra.mxu0 0.0
    %2333 = vmatprep.subr.mxu0 0.0
    %2334 = vmatpush1.msra.mxu0 0.0
    %2335 = vmatprep.subr.mxu0 0.0
    %2336 = vmatpush1.msra.mxu0 0.0
    %2337 = vmatprep.subr.mxu0 0.0
    %2338 = vmatpush1.msra.mxu0 0.0
    %2339 = vmatprep.subr.mxu0 0.0
    %2340 = vmatpush1.msra.mxu0 0.0
    %2341 = vmatprep.subr.mxu0 0.0
    %2342 = vmatpush1.msra.mxu0 0.0
    %2343 = vmatprep.subr.mxu0 0.0
    %2344 = vmatpush1.msra.mxu0 0.0
    %2345 = vmatprep.subr.mxu0 0.0
    %2346 = vmatpush1.msra.mxu0 0.0
    %2347 = vmatprep.subr.mxu0 0.0
    %2348 = vmatpush1.msra.mxu0 0.0
    %2349 = vmatprep.mubr.f32.mxu0 0.0
    %2350 = vmatmul.mubr.f32.gmra.mrb[0].mxu0 %v2274
    %v2351 = vpop.f32.mrb[0].mxu0
    %v2352 = vadd.f32 0.0, %v2351
    %v2353 = vpop.f32.mrb[0].mxu0
    %v2354 = vadd.f32 0.0, %v2353
    %2355 = vmatprep.mubr.f32.mxu0 0.0
    %2356 = vmatmul.mubr.f32.gmra.mrb[0].mxu0 %v2277
    %v2357 = vpop.f32.mrb[0].mxu0
    %v2358 = vadd.f32 0.0, %v2357
    %v2359 = vpop.f32.mrb[0].mxu0
    %v2360 = vadd.f32 0.0, %v2359
    %2361 = vdwg.mxu0
    %v2362 = vadd.f32 %v1759, %v2352
    %v2363 = vadd.f32 %v1760, %v2354
    %v2364 = vadd.f32 %v1761, %v2358
    %v2365 = vadd.f32 %v1762, %v2360
    %2366 = vmatprep.subr.mxu0 0.0
    %2367 = vmatpush1.msra.mxu0 %v2100
    %2368 = vmatprep.subr.mxu0 0.0
    %2369 = vmatpush1.msra.mxu0 0.0
    %2370 = vmatprep.subr.mxu0 0.0
    %2371 = vmatpush1.msra.mxu0 0.0
    %2372 = vmatprep.subr.mxu0 0.0
    %2373 = vmatpush1.msra.mxu0 0.0
    %2374 = vmatprep.subr.mxu0 0.0
    %2375 = vmatpush1.msra.mxu0 0.0
    %2376 = vmatprep.subr.mxu0 0.0
    %2377 = vmatpush1.msra.mxu0 0.0
    %2378 = vmatprep.subr.mxu0 0.0
    %2379 = vmatpush1.msra.mxu0 0.0
    %2380 = vmatprep.subr.mxu0 0.0
    %2381 = vmatpush1.msra.mxu0 0.0
    %2382 = vmatprep.subr.mxu0 0.0
    %2383 = vmatpush1.msra.mxu0 0.0
    %2384 = vmatprep.subr.mxu0 0.0
    %2385 = vmatpush1.msra.mxu0 0.0
    %2386 = vmatprep.subr.mxu0 0.0
    %2387 = vmatpush1.msra.mxu0 0.0
    %2388 = vmatprep.subr.mxu0 0.0
    %2389 = vmatpush1.msra.mxu0 0.0
    %2390 = vmatprep.subr.mxu0 0.0
    %2391 = vmatpush1.msra.mxu0 0.0
    %2392 = vmatprep.subr.mxu0 0.0
    %2393 = vmatpush1.msra.mxu0 0.0
    %2394 = vmatprep.subr.mxu0 0.0
    %2395 = vmatpush1.msra.mxu0 0.0
    %2396 = vmatprep.subr.mxu0 0.0
    %2397 = vmatpush1.msra.mxu0 0.0
    %2398 = vmatprep.subr.mxu0 0.0
    %2399 = vmatpush1.msra.mxu0 0.0
    %2400 = vmatprep.subr.mxu0 0.0
    %2401 = vmatpush1.msra.mxu0 0.0
    %2402 = vmatprep.subr.mxu0 0.0
    %2403 = vmatpush1.msra.mxu0 0.0
    %2404 = vmatprep.subr.mxu0 0.0
    %2405 = vmatpush1.msra.mxu0 0.0
    %2406 = vmatprep.subr.mxu0 0.0
    %2407 = vmatpush1.msra.mxu0 0.0
    %2408 = vmatprep.subr.mxu0 0.0
    %2409 = vmatpush1.msra.mxu0 0.0
    %2410 = vmatprep.subr.mxu0 0.0
    %2411 = vmatpush1.msra.mxu0 0.0
    %2412 = vmatprep.subr.mxu0 0.0
    %2413 = vmatpush1.msra.mxu0 0.0
    %2414 = vmatprep.subr.mxu0 0.0
    %2415 = vmatpush1.msra.mxu0 0.0
    %2416 = vmatprep.subr.mxu0 0.0
    %2417 = vmatpush1.msra.mxu0 0.0
    %2418 = vmatprep.subr.mxu0 0.0
    %2419 = vmatpush1.msra.mxu0 0.0
    %2420 = vmatprep.subr.mxu0 0.0
    %2421 = vmatpush1.msra.mxu0 0.0
    %2422 = vmatprep.subr.mxu0 0.0
    %2423 = vmatpush1.msra.mxu0 0.0
    %2424 = vmatprep.subr.mxu0 0.0
    %2425 = vmatpush1.msra.mxu0 0.0
    %2426 = vmatprep.subr.mxu0 0.0
    %2427 = vmatpush1.msra.mxu0 0.0
    %2428 = vmatprep.subr.mxu0 0.0
    %2429 = vmatpush1.msra.mxu0 0.0
    %2430 = vmatprep.mubr.f32.mxu0 0.0
    %2431 = vmatmul.mubr.f32.gmra.mrb[0].mxu0 %v2120
    %v2432 = vpop.f32.mrb[0].mxu0
    %v2433 = vadd.f32 0.0, %v2432
    %v2434 = vpop.f32.mrb[0].mxu0
    %2435 = vdwg.mxu0
    %2436 = vmatprep.subr.mxu0 0.0
    %2437 = vmatpush1.msra.mxu0 %v2433
    %2438 = vmatprep.subr.mxu0 0.0
    %2439 = vmatpush1.msra.mxu0 0.0
    %2440 = vmatprep.subr.mxu0 0.0
    %2441 = vmatpush1.msra.mxu0 0.0
    %2442 = vmatprep.subr.mxu0 0.0
    %2443 = vmatpush1.msra.mxu0 0.0
    %2444 = vmatprep.subr.mxu0 0.0
    %2445 = vmatpush1.msra.mxu0 0.0
    %2446 = vmatprep.subr.mxu0 0.0
    %2447 = vmatpush1.msra.mxu0 0.0
    %2448 = vmatprep.subr.mxu0 0.0
    %2449 = vmatpush1.msra.mxu0 0.0
    %2450 = vmatprep.subr.mxu0 0.0
    %2451 = vmatpush1.msra.mxu0 0.0
    %2452 = vmatprep.subr.mxu0 0.0
    %2453 = vmatpush1.msra.mxu0 0.0
    %2454 = vmatprep.subr.mxu0 0.0
    %2455 = vmatpush1.msra.mxu0 0.0
    %2456 = vmatprep.subr.mxu0 0.0
    %2457 = vmatpush1.msra.mxu0 0.0
    %2458 = vmatprep.subr.mxu0 0.0
    %2459 = vmatpush1.msra.mxu0 0.0
    %2460 = vmatprep.subr.mxu0 0.0
    %2461 = vmatpush1.msra.mxu0 0.0
    %2462 = vmatprep.subr.mxu0 0.0
    %2463 = vmatpush1.msra.mxu0 0.0
    %2464 = vmatprep.subr.mxu0 0.0
    %2465 = vmatpush1.msra.mxu0 0.0
    %2466 = vmatprep.subr.mxu0 0.0
    %2467 = vmatpush1.msra.mxu0 0.0
    %2468 = vmatprep.subr.mxu0 0.0
    %2469 = vmatpush1.msra.mxu0 0.0
    %2470 = vmatprep.subr.mxu0 0.0
    %2471 = vmatpush1.msra.mxu0 0.0
    %2472 = vmatprep.subr.mxu0 0.0
    %2473 = vmatpush1.msra.mxu0 0.0
    %2474 = vmatprep.subr.mxu0 0.0
    %2475 = vmatpush1.msra.mxu0 0.0
    %2476 = vmatprep.subr.mxu0 0.0
    %2477 = vmatpush1.msra.mxu0 0.0
    %2478 = vmatprep.subr.mxu0 0.0
    %2479 = vmatpush1.msra.mxu0 0.0
    %2480 = vmatprep.subr.mxu0 0.0
    %2481 = vmatpush1.msra.mxu0 0.0
    %2482 = vmatprep.subr.mxu0 0.0
    %2483 = vmatpush1.msra.mxu0 0.0
    %2484 = vmatprep.subr.mxu0 0.0
    %2485 = vmatpush1.msra.mxu0 0.0
    %2486 = vmatprep.subr.mxu0 0.0
    %2487 = vmatpush1.msra.mxu0 0.0
    %2488 = vmatprep.subr.mxu0 0.0
    %2489 = vmatpush1.msra.mxu0 0.0
    %2490 = vmatprep.subr.mxu0 0.0
    %2491 = vmatpush1.msra.mxu0 0.0
    %2492 = vmatprep.subr.mxu0 0.0
    %2493 = vmatpush1.msra.mxu0 0.0
    %2494 = vmatprep.subr.mxu0 0.0
    %2495 = vmatpush1.msra.mxu0 0.0
    %2496 = vmatprep.subr.mxu0 0.0
    %2497 = vmatpush1.msra.mxu0 0.0
    %2498 = vmatprep.subr.mxu0 0.0
    %2499 = vmatpush1.msra.mxu0 0.0
    %2500 = vmatprep.mubr.f32.mxu0 0.0
    %2501 = vmatmul.mubr.f32.gmra.mrb[0].mxu0 %v2193
    %v2502 = vpop.f32.mrb[0].mxu0
    %v2503 = vadd.f32 0.0, %v2502
    %v2504 = vpop.f32.mrb[0].mxu0
    %2505 = vmatprep.mubr.f32.mxu0 0.0
    %2506 = vmatmul.mubr.f32.gmra.mrb[0].mxu0 %v2196
    %v2507 = vpop.f32.mrb[0].mxu0
    %v2508 = vadd.f32 0.0, %v2507
    %v2509 = vpop.f32.mrb[0].mxu0
    %2510 = vdwg.mxu0
    %v2512 = vsel %vm310, %v2503, 0
    %v2515 = vsel %vm310, %v2508, 0
    %2517 = vmatprep.subr.mxu0 %v2110
    %2518 = vmatpush1.msra.mxu0 %v2109
    %2519 = vmatprep.subr.mxu0 %v2112
    %2520 = vmatpush1.msra.mxu0 %v2111
    %2521 = vmatprep.subr.mxu0 %v2114
    %2522 = vmatpush1.msra.mxu0 %v2113
    %2523 = vmatprep.subr.mxu0 %v2116
    %2524 = vmatpush1.msra.mxu0 %v2115
    %2525 = vmatprep.subr.mxu0 %v2283
    %2526 = vmatpush1.msra.mxu0 %v2280
    %2527 = vmatprep.subr.mxu0 0.0
    %2528 = vmatpush1.msra.mxu0 0.0
    %2529 = vmatprep.subr.mxu0 0.0
    %2530 = vmatpush1.msra.mxu0 0.0
    %2531 = vmatprep.subr.mxu0 0.0
    %2532 = vmatpush1.msra.mxu0 0.0
    %2533 = vmatprep.subr.mxu0 0.0
    %2534 = vmatpush1.msra.mxu0 0.0
    %2535 = vmatprep.subr.mxu0 0.0
    %2536 = vmatpush1.msra.mxu0 0.0
    %2537 = vmatprep.subr.mxu0 0.0
    %2538 = vmatpush1.msra.mxu0 0.0
    %2539 = vmatprep.subr.mxu0 0.0
    %2540 = vmatpush1.msra.mxu0 0.0
    %2541 = vmatprep.subr.mxu0 0.0
    %2542 = vmatpush1.msra.mxu0 0.0
    %2543 = vmatprep.subr.mxu0 0.0
    %2544 = vmatpush1.msra.mxu0 0.0
    %2545 = vmatprep.subr.mxu0 0.0
    %2546 = vmatpush1.msra.mxu0 0.0
    %2547 = vmatprep.subr.mxu0 0.0
    %2548 = vmatpush1.msra.mxu0 0.0
    %2549 = vmatprep.subr.mxu0 0.0
    %2550 = vmatpush1.msra.mxu0 0.0
    %2551 = vmatprep.subr.mxu0 0.0
    %2552 = vmatpush1.msra.mxu0 0.0
    %2553 = vmatprep.subr.mxu0 0.0
    %2554 = vmatpush1.msra.mxu0 0.0
    %2555 = vmatprep.subr.mxu0 0.0
    %2556 = vmatpush1.msra.mxu0 0.0
    %2557 = vmatprep.subr.mxu0 0.0
    %2558 = vmatpush1.msra.mxu0 0.0
    %2559 = vmatprep.subr.mxu0 0.0
    %2560 = vmatpush1.msra.mxu0 0.0
    %2561 = vmatprep.subr.mxu0 0.0
    %2562 = vmatpush1.msra.mxu0 0.0
    %2563 = vmatprep.subr.mxu0 0.0
    %2564 = vmatpush1.msra.mxu0 0.0
    %2565 = vmatprep.subr.mxu0 0.0
    %2566 = vmatpush1.msra.mxu0 0.0
    %2567 = vmatprep.subr.mxu0 0.0
    %2568 = vmatpush1.msra.mxu0 0.0
    %2569 = vmatprep.subr.mxu0 0.0
    %2570 = vmatpush1.msra.mxu0 0.0
    %2571 = vmatprep.subr.mxu0 0.0
    %2572 = vmatpush1.msra.mxu0 0.0
    %2573 = vmatprep.subr.mxu0 0.0
    %2574 = vmatpush1.msra.mxu0 0.0
    %2575 = vmatprep.subr.mxu0 0.0
    %2576 = vmatpush1.msra.mxu0 0.0
    %2577 = vmatprep.subr.mxu0 0.0
    %2578 = vmatpush1.msra.mxu0 0.0
    %2579 = vmatprep.subr.mxu0 0.0
    %2580 = vmatpush1.msra.mxu0 0.0
    %2581 = vmatprep.mubr.f32.mxu0 0.0
    %2582 = vmatmul.mubr.f32.gmra.mrb[0].mxu0 %v2512
    %v2583 = vpop.f32.mrb[0].mxu0
    %v2584 = vadd.f32 0.0, %v2583
    %v2585 = vpop.f32.mrb[0].mxu0
    %v2586 = vadd.f32 0.0, %v2585
    %2587 = vmatprep.mubr.f32.mxu0 0.0
    %2588 = vmatmul.mubr.f32.gmra.mrb[0].mxu0 %v2515
    %v2589 = vpop.f32.mrb[0].mxu0
    %v2590 = vadd.f32 0.0, %v2589
    %v2591 = vpop.f32.mrb[0].mxu0
    %v2592 = vadd.f32 0.0, %v2591
    %2593 = vdwg.mxu0
    %v2594 = vadd.f32 %v1991, %v2584
    %v2595 = vadd.f32 %v1992, %v2586
    %v2596 = vadd.f32 %v1993, %v2590
    %v2597 = vadd.f32 %v1994, %v2592
    %2599 = vset.pattern.permute.xlu0 0
    %2600 = vperm.xlu0 %2599, %v33
    %v2601 = vpop.permute.xlu0 %2600
    %2604 = vset.pattern.permute.xlu0 0
    %2605 = vperm.xlu0 %2604, %v34
    %v2606 = vpop.permute.xlu0 %2605
    %v2608 = vadd.f32 %v2362, %v2601
    %v2609 = vadd.f32 %v2363, %v2601
    %v2610 = vadd.f32 %v2364, %v2606
    %v2611 = vadd.f32 %v2365, %v2606
    %v2612 = vmax.f32 %v2608, 0.0
    %v2613 = vmax.f32 %v2609, 0.0
    %v2614 = vmax.f32 %v2610, 0.0
    %v2615 = vmax.f32 %v2611, 0.0
    %2616 = vst [vmem:[#allocation2] sm:$0xff] %v2612
    %2617 = vst [vmem:[#allocation2 + $0x8] sm:$0xff] %v2613
    %2618 = vst [vmem:[#allocation2 + $0x10] sm:$0xff] %v2614
    %2619 = vst [vmem:[#allocation2 + $0x18] sm:$0xff] %v2615
    %v2620 = vadd.f32 %v2594, %v2601
    %v2621 = vadd.f32 %v2595, %v2601
    %v2622 = vadd.f32 %v2596, %v2606
    %v2623 = vadd.f32 %v2597, %v2606
    %v2624 = vmax.f32 %v2620, 0.0
    %v2625 = vmax.f32 %v2621, 0.0
    %v2626 = vmax.f32 %v2622, 0.0
    %v2627 = vmax.f32 %v2623, 0.0
    %s2628 = scalar_lea.vmem [#allocation2], 32
    %2629 = vst [vmem:[%s2628] sm:$0xff] %v2624
    %2630 = vst [vmem:[%s2628 + $0x8] sm:$0xff] %v2625
    %2631 = vst [vmem:[%s2628 + $0x10] sm:$0xff] %v2626
    %2632 = vst [vmem:[%s2628 + $0x18] sm:$0xff] %v2627
    // Predicated region
    $region30: #{tpu_custom_call.1} parent=1 // pred_check
      _
    $region31: #{tpu_custom_call.1} parent=1 // pred_check_branch
      %2634 = sbr.rel (0) target = $region33
    $region32: #{tpu_custom_call.1} parent=1 // pred_region
      %s2636 = ssub.s32 1024, 1024
      %2637 = vsyncadd [#allocation3], %s2636
      %s2638 = sshll.u32 [#allocation2], 4
      %s2639 = int_to_ptr.vmem [resolvable:$true] %s2638
      %2644 = dma.vmem_to_hbm [thread:$0]  %s2639, 1024, %s7, [#allocation3], 256, 256, 16
    $region33: #{tpu_custom_call.1} parent=1 // pred_fallthru
      _
    // Predicated region
    $region34: #{tpu_custom_call.1} parent=1 // pred_check
      _
    $region35: #{tpu_custom_call.1} parent=1 // pred_check_branch
      %2646 = sbr.rel (0) target = $region37
    $region36: #{tpu_custom_call.1} parent=1 // pred_region
      %2647 = dma.done [#allocation3], 1024
    $region37: #{tpu_custom_call.1} parent=1 // pred_fallthru
      _
    %2648 = vsyncpa [#allocation3], 1

</llo_original>
